<compile_context>
chip_gen: v7x
topology: tpu7x:2x2x1
jax: 0.10.0
libtpu: 0.0.40
codegen_flags: <defaults>
</compile_context>

<pallas_src>
import functools

import jax
import jax.numpy as jnp
from jax.experimental import pallas as pl
from jax.experimental.pallas import tpu as pltpu

IN_FEATURES = 16
INFL = 4
HIDDEN = IN_FEATURES * INFL   # 64
NUM_CLASSES = 2
DEFAULT_TILE = 1024           # rows per grid step (multiple of 8)


def net_kernel(x_ref, w1_ref, w2_ref, w3_ref, w4_ref, o_ref):
    """x_ref: (T, 16) f32.  w1/w2/w3: (in, out) bf16 +/-1.  w4: (2, 64) bf16 +/-1.
    o_ref: (2, T) f32 -- rows 0/1 are log-softmax of class 0/1 (lane-dense)."""

    def binarize_act(v):
        # TODO(synk): BinarizeLinear source unavailable; deterministic sign
        # binarization (0 -> +1) of activations; +/-1 is exact in bf16.
        return jnp.where(v >= 0, 1.0, -1.0).astype(jnp.bfloat16)

    def coarse_norm(v):
        # TODO(synk): CoarseNormalization source unavailable; LayerNorm over the
        # feature axis, elementwise_affine=False, bias=False, eps=1e-5.
        # One-pass moments: inputs are exact small integers, so E[x^2]-E[x]^2
        # is computed exactly in f32 (halves the cross-lane reductions).
        mu = jnp.mean(v, axis=-1, keepdims=True)
        ex2 = jnp.mean(v * v, axis=-1, keepdims=True)
        var = ex2 - mu * mu
        return (v - mu) * jax.lax.rsqrt(var + 1e-5)

    def hardtanh(v):
        return jnp.clip(v, -1.0, 1.0)

    def bin_linear(v, w_ref):
        return jnp.dot(binarize_act(v), w_ref[...],
                       preferred_element_type=jnp.float32)

    h = bin_linear(x_ref[...], w1_ref)          # (T, 64)
    h = hardtanh(coarse_norm(h))
    h = bin_linear(h, w2_ref)                   # (T, 64)
    h = hardtanh(coarse_norm(h))
    h = bin_linear(h, w3_ref)                   # (T, 64)
    h = hardtanh(coarse_norm(h))

    # fc4 computed transposed: (2, 64) . (T, 64)^T -> (2, T) -> lane-dense stores.
    logits_t = jax.lax.dot_general(
        w4_ref[...], binarize_act(h),
        dimension_numbers=(((1,), (1,)), ((), ())),
        preferred_element_type=jnp.float32)     # (2, T)

    # Two-class log-softmax in closed form (no cross-lane max/sum):
    #   out0 = -softplus(l1 - l0), out1 = -softplus(l0 - l1)
    d = logits_t[0:1, :] - logits_t[1:2, :]     # l0 - l1, shape (1, T)

    def softplus(z):
        return jnp.maximum(z, 0.0) + jnp.log(1.0 + jnp.exp(-jnp.abs(z)))

    o_ref[0:1, :] = -softplus(-d)
    o_ref[1:2, :] = -softplus(d)


def _binarize_weights(w):
    # +/-1 is exact in bf16; hoisted out of the kernel (loop-invariant weights).
    return jnp.where(w >= 0, 1.0, -1.0).astype(jnp.bfloat16)


@functools.partial(jax.jit, static_argnames=("tile",))
def net_forward(x, w1, w2, w3, w4, *, tile=DEFAULT_TILE):
    """x: any array reshapeable to (-1, 16). Weights in PyTorch (out, in) layout.
    Returns (N, 2) log-softmax, matching Net.forward."""
    x_flat = x.reshape(-1, IN_FEATURES).astype(jnp.float32)
    n = x_flat.shape[0]

    # Pick a batch tile (multiple of 8) and pad N so blocks divide exactly.
    if n <= tile:
        tile_n = ((n + 7) // 8) * 8
        n_pad = tile_n
    else:
        tile_n = tile
        n_pad = pl.cdiv(n, tile_n) * tile_n
    if n_pad != n:
        x_flat = jnp.pad(x_flat, ((0, n_pad - n), (0, 0)))

    # Pre-binarize (and pre-transpose) the loop-invariant weights once.
    w1t = _binarize_weights(w1).T       # (16, 64)
    w2t = _binarize_weights(w2).T       # (64, 64)
    w3t = _binarize_weights(w3).T       # (64, 64)
    w4b = _binarize_weights(w4)         # (2, 64), kept (out, in) for transposed fc4

    grid = (n_pad // tile_n,)
    weight_spec = lambda shape: pl.BlockSpec(shape, lambda i: (0, 0))

    out_t = pl.pallas_call(
        net_kernel,
        out_shape=jax.ShapeDtypeStruct((NUM_CLASSES, n_pad), jnp.float32),
        grid=grid,
        in_specs=[
            pl.BlockSpec((tile_n, IN_FEATURES), lambda i: (i, 0)),
            weight_spec(w1t.shape),
            weight_spec(w2t.shape),
            weight_spec(w3t.shape),
            weight_spec(w4b.shape),
        ],
        out_specs=pl.BlockSpec((NUM_CLASSES, tile_n), lambda i: (0, i)),
        compiler_params=pltpu.CompilerParams(
            dimension_semantics=("parallel",)),
    )(x_flat, w1t, w2t, w3t, w4b)

    # Tiny (2, N) -> (N, 2) layout fix + drop padded rows (plain-JAX glue).
    return out_t[:, :n].T


def net_reference(x, w1, w2, w3, w4):
    """Pure-JAX reference with identical assumed semantics (for verification)."""
    def binz(v):
        return jnp.where(v >= 0, 1.0, -1.0).astype(jnp.float32)

    def norm(v):
        mu = jnp.mean(v, axis=-1, keepdims=True)
        var = jnp.mean((v - mu) ** 2, axis=-1, keepdims=True)
        return (v - mu) * jax.lax.rsqrt(var + 1e-5)

    h = x.reshape(-1, IN_FEATURES).astype(jnp.float32)
    for w in (w1, w2, w3):
        h = jnp.clip(norm(jnp.dot(binz(h), binz(w).T)), -1.0, 1.0)
    logits = jnp.dot(binz(h), binz(w4).T)
    return jax.nn.log_softmax(logits, axis=-1)


def init_params(key):
    """Deterministic nn.Linear-style init (uniform(-1/sqrt(fan_in), 1/sqrt(fan_in)))."""
    def linear_init(k, out_f, in_f):
        bound = 1.0 / jnp.sqrt(in_f)
        return jax.random.uniform(k, (out_f, in_f), jnp.float32, -bound, bound)

    k1, k2, k3, k4 = jax.random.split(key, 4)
    w1 = linear_init(k1, HIDDEN, IN_FEATURES)      # fc1: 16 -> 64
    w2 = linear_init(k2, HIDDEN, HIDDEN)           # fc2: 64 -> 64
    w3 = linear_init(k3, HIDDEN, HIDDEN)           # fc3: 64 -> 64
    w4 = linear_init(k4, NUM_CLASSES, HIDDEN)      # fc4: 64 -> 2
    return w1, w2, w3, w4


if __name__ == "__main__":
    key = jax.random.PRNGKey(0)
    k_x, k_p = jax.random.split(key)
    # NCHW-style input; forward flattens to (-1, 16): (2*4*16*16)/16 = 128 rows.
    x = jax.random.normal(k_x, (2, 4, 16, 16), dtype=jnp.float32)
    w1, w2, w3, w4 = init_params(k_p)

    out = net_forward(x, w1, w2, w3, w4)
    out = jax.block_until_ready(out)

    assert out.shape == (128, NUM_CLASSES)
    # log-softmax rows must exponentiate-sum to ~1
    assert jnp.allclose(jnp.sum(jnp.exp(out), axis=1), 1.0, atol=1e-5)
    # match the pure-JAX reference of the same module semantics
    ref = net_reference(x, w1, w2, w3, w4)
    assert jnp.allclose(out, ref, atol=1e-5, rtol=1e-5), float(jnp.max(jnp.abs(out - ref)))
    print("KERNEL_OK")
</pallas_src>

<mosaic_0001>
module attributes {stable_mosaic.version = 11 : i64} {
  func.func @net_kernel(%arg0: i32, %arg1: memref<128x16xf32, #tpu.memory_space<vmem>>, %arg2: memref<16x64xbf16, #tpu.memory_space<vmem>>, %arg3: memref<64x64xbf16, #tpu.memory_space<vmem>>, %arg4: memref<64x64xbf16, #tpu.memory_space<vmem>>, %arg5: memref<2x64xbf16, #tpu.memory_space<vmem>>, %arg6: memref<2x128xf32, #tpu.memory_space<vmem>>) attributes {dimension_semantics = [#tpu.dimension_semantics<parallel>], iteration_bounds = array<i64: 1>, scalar_prefetch = 0 : i64, scratch_operands = 0 : i64, tpu.core_type = #tpu.core_type<tc>, window_params = [{transform_indices = @transform_0, window_bounds = array<i64: 128, 16>}, {pipeline_mode = #tpu.pipeline_mode<synchronous>, transform_indices = @transform_1, window_bounds = array<i64: 16, 64>}, {pipeline_mode = #tpu.pipeline_mode<synchronous>, transform_indices = @transform_2, window_bounds = array<i64: 64, 64>}, {pipeline_mode = #tpu.pipeline_mode<synchronous>, transform_indices = @transform_3, window_bounds = array<i64: 64, 64>}, {pipeline_mode = #tpu.pipeline_mode<synchronous>, transform_indices = @transform_4, window_bounds = array<i64: 2, 64>}, {transform_indices = @transform_5, window_bounds = array<i64: 2, 128>}]} {
    %c0 = arith.constant 0 : index
    %c0_0 = arith.constant 0 : index
    %0 = vector.load %arg1[%c0, %c0_0] : memref<128x16xf32, #tpu.memory_space<vmem>>, vector<128x16xf32>
    %cst = arith.constant 0.000000e+00 : f32
    %1 = vector.broadcast %cst : f32 to vector<128x16xf32>
    %2 = arith.cmpf oge, %0, %1 : vector<128x16xf32>
    %cst_1 = arith.constant 1.000000e+00 : f32
    %cst_2 = arith.constant -1.000000e+00 : f32
    %3 = vector.broadcast %cst_1 : f32 to vector<128x16xf32>
    %4 = vector.broadcast %cst_2 : f32 to vector<128x16xf32>
    %5 = arith.select %2, %3, %4 : vector<128x16xi1>, vector<128x16xf32>
    %6 = arith.truncf %5 : vector<128x16xf32> to vector<128x16xbf16>
    %c0_3 = arith.constant 0 : index
    %c0_4 = arith.constant 0 : index
    %7 = vector.load %arg2[%c0_3, %c0_4] : memref<16x64xbf16, #tpu.memory_space<vmem>>, vector<16x64xbf16>
    %cst_5 = arith.constant dense<0.000000e+00> : vector<128x64xf32>
    %8 = tpu.matmul %6, %7, %cst_5 {dimension_numbers = #tpu.dot_dimension_numbers<[1], [0], [0], [1], [0, 0, 1, 1], [], []>} : vector<128x16xbf16>, vector<16x64xbf16>, vector<128x64xf32> -> vector<128x64xf32>
    %cst_6 = arith.constant dense<0.000000e+00> : vector<128xf32>
    %9 = vector.multi_reduction <add>, %8, %cst_6 [1] : vector<128x64xf32> to vector<128xf32>
    %10 = vector.shape_cast %9 : vector<128xf32> to vector<128x1xf32>
    %cst_7 = arith.constant 6.400000e+01 : f32
    %11 = vector.broadcast %cst_7 : f32 to vector<128x1xf32>
    %12 = arith.divf %10, %11 : vector<128x1xf32>
    %13 = arith.mulf %8, %8 : vector<128x64xf32>
    %cst_8 = arith.constant dense<0.000000e+00> : vector<128xf32>
    %14 = vector.multi_reduction <add>, %13, %cst_8 [1] : vector<128x64xf32> to vector<128xf32>
    %15 = vector.shape_cast %14 : vector<128xf32> to vector<128x1xf32>
    %cst_9 = arith.constant 6.400000e+01 : f32
    %16 = vector.broadcast %cst_9 : f32 to vector<128x1xf32>
    %17 = arith.divf %15, %16 : vector<128x1xf32>
    %18 = arith.mulf %12, %12 : vector<128x1xf32>
    %19 = arith.subf %17, %18 : vector<128x1xf32>
    %20 = vector.broadcast %12 : vector<128x1xf32> to vector<128x64xf32>
    %21 = arith.subf %8, %20 : vector<128x64xf32>
    %cst_10 = arith.constant 9.99999974E-6 : f32
    %22 = vector.broadcast %cst_10 : f32 to vector<128x1xf32>
    %23 = arith.addf %19, %22 : vector<128x1xf32>
    %24 = math.rsqrt %23 : vector<128x1xf32>
    %25 = vector.broadcast %24 : vector<128x1xf32> to vector<128x64xf32>
    %26 = arith.mulf %21, %25 : vector<128x64xf32>
    %cst_11 = arith.constant -1.000000e+00 : f32
    %cst_12 = arith.constant 1.000000e+00 : f32
    %27 = vector.broadcast %cst_11 : f32 to vector<128x64xf32>
    %28 = arith.maximumf %27, %26 : vector<128x64xf32>
    %29 = vector.broadcast %cst_12 : f32 to vector<128x64xf32>
    %30 = arith.minimumf %29, %28 : vector<128x64xf32>
    %cst_13 = arith.constant 0.000000e+00 : f32
    %31 = vector.broadcast %cst_13 : f32 to vector<128x64xf32>
    %32 = arith.cmpf oge, %30, %31 : vector<128x64xf32>
    %cst_14 = arith.constant 1.000000e+00 : f32
    %cst_15 = arith.constant -1.000000e+00 : f32
    %33 = vector.broadcast %cst_14 : f32 to vector<128x64xf32>
    %34 = vector.broadcast %cst_15 : f32 to vector<128x64xf32>
    %35 = arith.select %32, %33, %34 : vector<128x64xi1>, vector<128x64xf32>
    %36 = arith.truncf %35 : vector<128x64xf32> to vector<128x64xbf16>
    %c0_16 = arith.constant 0 : index
    %c0_17 = arith.constant 0 : index
    %37 = vector.load %arg3[%c0_16, %c0_17] : memref<64x64xbf16, #tpu.memory_space<vmem>>, vector<64x64xbf16>
    %cst_18 = arith.constant dense<0.000000e+00> : vector<128x64xf32>
    %38 = tpu.matmul %36, %37, %cst_18 {dimension_numbers = #tpu.dot_dimension_numbers<[1], [0], [0], [1], [0, 0, 1, 1], [], []>} : vector<128x64xbf16>, vector<64x64xbf16>, vector<128x64xf32> -> vector<128x64xf32>
    %cst_19 = arith.constant dense<0.000000e+00> : vector<128xf32>
    %39 = vector.multi_reduction <add>, %38, %cst_19 [1] : vector<128x64xf32> to vector<128xf32>
    %40 = vector.shape_cast %39 : vector<128xf32> to vector<128x1xf32>
    %cst_20 = arith.constant 6.400000e+01 : f32
    %41 = vector.broadcast %cst_20 : f32 to vector<128x1xf32>
    %42 = arith.divf %40, %41 : vector<128x1xf32>
    %43 = arith.mulf %38, %38 : vector<128x64xf32>
    %cst_21 = arith.constant dense<0.000000e+00> : vector<128xf32>
    %44 = vector.multi_reduction <add>, %43, %cst_21 [1] : vector<128x64xf32> to vector<128xf32>
    %45 = vector.shape_cast %44 : vector<128xf32> to vector<128x1xf32>
    %cst_22 = arith.constant 6.400000e+01 : f32
    %46 = vector.broadcast %cst_22 : f32 to vector<128x1xf32>
    %47 = arith.divf %45, %46 : vector<128x1xf32>
    %48 = arith.mulf %42, %42 : vector<128x1xf32>
    %49 = arith.subf %47, %48 : vector<128x1xf32>
    %50 = vector.broadcast %42 : vector<128x1xf32> to vector<128x64xf32>
    %51 = arith.subf %38, %50 : vector<128x64xf32>
    %cst_23 = arith.constant 9.99999974E-6 : f32
    %52 = vector.broadcast %cst_23 : f32 to vector<128x1xf32>
    %53 = arith.addf %49, %52 : vector<128x1xf32>
    %54 = math.rsqrt %53 : vector<128x1xf32>
    %55 = vector.broadcast %54 : vector<128x1xf32> to vector<128x64xf32>
    %56 = arith.mulf %51, %55 : vector<128x64xf32>
    %cst_24 = arith.constant -1.000000e+00 : f32
    %cst_25 = arith.constant 1.000000e+00 : f32
    %57 = vector.broadcast %cst_24 : f32 to vector<128x64xf32>
    %58 = arith.maximumf %57, %56 : vector<128x64xf32>
    %59 = vector.broadcast %cst_25 : f32 to vector<128x64xf32>
    %60 = arith.minimumf %59, %58 : vector<128x64xf32>
    %cst_26 = arith.constant 0.000000e+00 : f32
    %61 = vector.broadcast %cst_26 : f32 to vector<128x64xf32>
    %62 = arith.cmpf oge, %60, %61 : vector<128x64xf32>
    %cst_27 = arith.constant 1.000000e+00 : f32
    %cst_28 = arith.constant -1.000000e+00 : f32
    %63 = vector.broadcast %cst_27 : f32 to vector<128x64xf32>
    %64 = vector.broadcast %cst_28 : f32 to vector<128x64xf32>
    %65 = arith.select %62, %63, %64 : vector<128x64xi1>, vector<128x64xf32>
    %66 = arith.truncf %65 : vector<128x64xf32> to vector<128x64xbf16>
    %c0_29 = arith.constant 0 : index
    %c0_30 = arith.constant 0 : index
    %67 = vector.load %arg4[%c0_29, %c0_30] : memref<64x64xbf16, #tpu.memory_space<vmem>>, vector<64x64xbf16>
    %cst_31 = arith.constant dense<0.000000e+00> : vector<128x64xf32>
    %68 = tpu.matmul %66, %67, %cst_31 {dimension_numbers = #tpu.dot_dimension_numbers<[1], [0], [0], [1], [0, 0, 1, 1], [], []>} : vector<128x64xbf16>, vector<64x64xbf16>, vector<128x64xf32> -> vector<128x64xf32>
    %cst_32 = arith.constant dense<0.000000e+00> : vector<128xf32>
    %69 = vector.multi_reduction <add>, %68, %cst_32 [1] : vector<128x64xf32> to vector<128xf32>
    %70 = vector.shape_cast %69 : vector<128xf32> to vector<128x1xf32>
    %cst_33 = arith.constant 6.400000e+01 : f32
    %71 = vector.broadcast %cst_33 : f32 to vector<128x1xf32>
    %72 = arith.divf %70, %71 : vector<128x1xf32>
    %73 = arith.mulf %68, %68 : vector<128x64xf32>
    %cst_34 = arith.constant dense<0.000000e+00> : vector<128xf32>
    %74 = vector.multi_reduction <add>, %73, %cst_34 [1] : vector<128x64xf32> to vector<128xf32>
    %75 = vector.shape_cast %74 : vector<128xf32> to vector<128x1xf32>
    %cst_35 = arith.constant 6.400000e+01 : f32
    %76 = vector.broadcast %cst_35 : f32 to vector<128x1xf32>
    %77 = arith.divf %75, %76 : vector<128x1xf32>
    %78 = arith.mulf %72, %72 : vector<128x1xf32>
    %79 = arith.subf %77, %78 : vector<128x1xf32>
    %80 = vector.broadcast %72 : vector<128x1xf32> to vector<128x64xf32>
    %81 = arith.subf %68, %80 : vector<128x64xf32>
    %cst_36 = arith.constant 9.99999974E-6 : f32
    %82 = vector.broadcast %cst_36 : f32 to vector<128x1xf32>
    %83 = arith.addf %79, %82 : vector<128x1xf32>
    %84 = math.rsqrt %83 : vector<128x1xf32>
    %85 = vector.broadcast %84 : vector<128x1xf32> to vector<128x64xf32>
    %86 = arith.mulf %81, %85 : vector<128x64xf32>
    %cst_37 = arith.constant -1.000000e+00 : f32
    %cst_38 = arith.constant 1.000000e+00 : f32
    %87 = vector.broadcast %cst_37 : f32 to vector<128x64xf32>
    %88 = arith.maximumf %87, %86 : vector<128x64xf32>
    %89 = vector.broadcast %cst_38 : f32 to vector<128x64xf32>
    %90 = arith.minimumf %89, %88 : vector<128x64xf32>
    %c0_39 = arith.constant 0 : index
    %c0_40 = arith.constant 0 : index
    %91 = vector.load %arg5[%c0_39, %c0_40] : memref<2x64xbf16, #tpu.memory_space<vmem>>, vector<2x64xbf16>
    %cst_41 = arith.constant 0.000000e+00 : f32
    %92 = vector.broadcast %cst_41 : f32 to vector<128x64xf32>
    %93 = arith.cmpf oge, %90, %92 : vector<128x64xf32>
    %cst_42 = arith.constant 1.000000e+00 : f32
    %cst_43 = arith.constant -1.000000e+00 : f32
    %94 = vector.broadcast %cst_42 : f32 to vector<128x64xf32>
    %95 = vector.broadcast %cst_43 : f32 to vector<128x64xf32>
    %96 = arith.select %93, %94, %95 : vector<128x64xi1>, vector<128x64xf32>
    %97 = arith.truncf %96 : vector<128x64xf32> to vector<128x64xbf16>
    %cst_44 = arith.constant dense<0.000000e+00> : vector<2x128xf32>
    %98 = tpu.matmul %91, %97, %cst_44 {dimension_numbers = #tpu.dot_dimension_numbers<[1], [1], [0], [0], [0, 0, 1, 0], [], []>} : vector<2x64xbf16>, vector<128x64xbf16>, vector<2x128xf32> -> vector<2x128xf32>
    %99 = vector.extract_strided_slice %98 {offsets = [0, 0], sizes = [1, 128], strides = [1, 1]} : vector<2x128xf32> to vector<1x128xf32>
    %100 = vector.extract_strided_slice %98 {offsets = [1, 0], sizes = [1, 128], strides = [1, 1]} : vector<2x128xf32> to vector<1x128xf32>
    %101 = arith.subf %99, %100 : vector<1x128xf32>
    %cst_45 = arith.constant 0.000000e+00 : f32
    %102 = vector.broadcast %cst_45 : f32 to vector<1x128xf32>
    %103 = arith.subf %102, %101 : vector<1x128xf32>
    %cst_46 = arith.constant 0.000000e+00 : f32
    %104 = vector.broadcast %cst_46 : f32 to vector<1x128xf32>
    %105 = arith.maximumf %103, %104 : vector<1x128xf32>
    %106 = math.absf %103 : vector<1x128xf32>
    %cst_47 = arith.constant 0.000000e+00 : f32
    %107 = vector.broadcast %cst_47 : f32 to vector<1x128xf32>
    %108 = arith.subf %107, %106 : vector<1x128xf32>
    %109 = math.exp %108 : vector<1x128xf32>
    %cst_48 = arith.constant 1.000000e+00 : f32
    %110 = vector.broadcast %cst_48 : f32 to vector<1x128xf32>
    %111 = arith.addf %110, %109 : vector<1x128xf32>
    %112 = math.log %111 : vector<1x128xf32>
    %113 = arith.addf %105, %112 : vector<1x128xf32>
    %cst_49 = arith.constant 0.000000e+00 : f32
    %114 = vector.broadcast %cst_49 : f32 to vector<1x128xf32>
    %115 = arith.subf %114, %113 : vector<1x128xf32>
    %c0_50 = arith.constant 0 : index
    %c0_51 = arith.constant 0 : index
    %116 = vector.load %arg6[%c0_50, %c0_51] : memref<2x128xf32, #tpu.memory_space<vmem>>, vector<1x128xf32>
    tpu.vector_store %arg6[%c0_50, %c0_51], %115 {strides = array<i32>} : memref<2x128xf32, #tpu.memory_space<vmem>>, vector<1x128xf32>,
    %cst_52 = arith.constant 0.000000e+00 : f32
    %117 = vector.broadcast %cst_52 : f32 to vector<1x128xf32>
    %118 = arith.maximumf %101, %117 : vector<1x128xf32>
    %119 = math.absf %101 : vector<1x128xf32>
    %cst_53 = arith.constant 0.000000e+00 : f32
    %120 = vector.broadcast %cst_53 : f32 to vector<1x128xf32>
    %121 = arith.subf %120, %119 : vector<1x128xf32>
    %122 = math.exp %121 : vector<1x128xf32>
    %cst_54 = arith.constant 1.000000e+00 : f32
    %123 = vector.broadcast %cst_54 : f32 to vector<1x128xf32>
    %124 = arith.addf %123, %122 : vector<1x128xf32>
    %125 = math.log %124 : vector<1x128xf32>
    %126 = arith.addf %118, %125 : vector<1x128xf32>
    %cst_55 = arith.constant 0.000000e+00 : f32
    %127 = vector.broadcast %cst_55 : f32 to vector<1x128xf32>
    %128 = arith.subf %127, %126 : vector<1x128xf32>
    %c1 = arith.constant 1 : index
    %c0_56 = arith.constant 0 : index
    %129 = vector.load %arg6[%c1, %c0_56] : memref<2x128xf32, #tpu.memory_space<vmem>>, vector<1x128xf32>
    tpu.vector_store %arg6[%c1, %c0_56], %128 {strides = array<i32>} : memref<2x128xf32, #tpu.memory_space<vmem>>, vector<1x128xf32>,
    return
  }
  func.func @transform_0(%arg0: i32) -> (i32, i32) {
    %c0_i32 = arith.constant 0 : i32
    %c0_i32_0 = arith.constant 0 : i32
    return %arg0, %c0_i32 : i32, i32
  }
  func.func @transform_1(%arg0: i32) -> (i32, i32) {
    %c0_i32 = arith.constant 0 : i32
    %c0_i32_0 = arith.constant 0 : i32
    %c0_i32_1 = arith.constant 0 : i32
    return %c0_i32, %c0_i32_0 : i32, i32
  }
  func.func @transform_2(%arg0: i32) -> (i32, i32) {
    %c0_i32 = arith.constant 0 : i32
    %c0_i32_0 = arith.constant 0 : i32
    %c0_i32_1 = arith.constant 0 : i32
    return %c0_i32, %c0_i32_0 : i32, i32
  }
  func.func @transform_3(%arg0: i32) -> (i32, i32) {
    %c0_i32 = arith.constant 0 : i32
    %c0_i32_0 = arith.constant 0 : i32
    %c0_i32_1 = arith.constant 0 : i32
    return %c0_i32, %c0_i32_0 : i32, i32
  }
  func.func @transform_4(%arg0: i32) -> (i32, i32) {
    %c0_i32 = arith.constant 0 : i32
    %c0_i32_0 = arith.constant 0 : i32
    %c0_i32_1 = arith.constant 0 : i32
    return %c0_i32, %c0_i32_0 : i32, i32
  }
  func.func @transform_5(%arg0: i32) -> (i32, i32) {
    %c0_i32 = arith.constant 0 : i32
    %c0_i32_0 = arith.constant 0 : i32
    return %c0_i32, %arg0 : i32, i32
  }
}

</mosaic_0001>

<llo_original>
// kernel: net_forward.1
$region0: #{net_forward.1}
  #allocation0 [shape = 'u32[]', space=smem, size = 0x4, offset = 0x4, fixed_abs, tag = 'smem constant byte address 0x4 - core index']
  #allocation1 [shape = 'u32[144,128]{1,0:T(1,128)}', space=vmem, size = 0x12000, scoped, tag = 'internal scratch']
  %s0 = inlined_call_operand.vmem [shape: f32[128,16], index: 0, kind: input, shape index: {}]
  %s1 = inlined_call_operand.vmem [shape: bf16[16,64], index: 1, kind: input, shape index: {}]
  %s2 = inlined_call_operand.vmem [shape: bf16[64,64], index: 2, kind: input, shape index: {}]
  %s3 = inlined_call_operand.vmem [shape: bf16[64,64], index: 3, kind: input, shape index: {}]
  %s4 = inlined_call_operand.vmem [shape: bf16[2,64], index: 4, kind: input, shape index: {}]
  %s5 = inlined_call_operand.hbm [shape: f32[2,128], index: 5, kind: output, shape index: {}]
  %s6 = sld [smem:[#allocation0]]
  $region30: #{net_forward.1} parent=0
    _
  %s8 = ssub.s32 1, %s6
  %s9 = scalar_select 0, %s8, %s6
  $region1: #{net_forward.1} parent=0
    #allocation2 [shape = 'u8[1024]{0}', space=vmem, size = 0x400, scoped, tag = 'output window, operand 0, single buffered']
    #allocation3 [shape = 's32[1]{0}', space=sflag, size = 0x4, scoped, tag = 'scoped memory for net_forward.1']
    %10 = vsyncpa [#allocation3], 0
    // Predicated region
    $region2: #{net_forward.1} parent=1 // pred_check
      _
    $region3: #{net_forward.1} parent=1 // pred_check_branch
      %12 = sbr.rel (0) target = $region5
    $region4: #{net_forward.1} parent=1 // pred_region
      _
    $region5: #{net_forward.1} parent=1 // pred_fallthru
      _
    // Predicated region
    $region6: #{net_forward.1} parent=1 // pred_check
      _
    $region7: #{net_forward.1} parent=1 // pred_check_branch
      %14 = sbr.rel (0) target = $region9
    $region8: #{net_forward.1} parent=1 // pred_region
      _
    $region9: #{net_forward.1} parent=1 // pred_fallthru
      _
    // Predicated region
    $region10: #{net_forward.1} parent=1 // pred_check
      _
    $region11: #{net_forward.1} parent=1 // pred_check_branch
      %16 = sbr.rel (0) target = $region13
    $region12: #{net_forward.1} parent=1 // pred_region
      _
    $region13: #{net_forward.1} parent=1 // pred_fallthru
      _
    // Predicated region
    $region14: #{net_forward.1} parent=1 // pred_check
      _
    $region15: #{net_forward.1} parent=1 // pred_check_branch
      %18 = sbr.rel (0) target = $region17
    $region16: #{net_forward.1} parent=1 // pred_region
      _
    $region17: #{net_forward.1} parent=1 // pred_fallthru
      _
    // Predicated region
    $region18: #{net_forward.1} parent=1 // pred_check
      _
    $region19: #{net_forward.1} parent=1 // pred_check_branch
      %20 = sbr.rel (0) target = $region21
    $region20: #{net_forward.1} parent=1 // pred_region
      _
    $region21: #{net_forward.1} parent=1 // pred_fallthru
      _
    %v22 = vld [vmem:[%s0] sm:$0xff]
    %v23 = vld [vmem:[%s0 + $0x8] sm:$0xff]
    %v24 = vld [vmem:[%s0 + $0x10] sm:$0xff]
    %v25 = vld [vmem:[%s0 + $0x18] sm:$0xff]
    %v26 = vld [vmem:[%s0 + $0x20] sm:$0xff]
    %v27 = vld [vmem:[%s0 + $0x28] sm:$0xff]
    %v28 = vld [vmem:[%s0 + $0x30] sm:$0xff]
    %v29 = vld [vmem:[%s0 + $0x38] sm:$0xff]
    %v30 = vld [vmem:[%s0 + $0x40] sm:$0xff]
    %v31 = vld [vmem:[%s0 + $0x48] sm:$0xff]
    %v32 = vld [vmem:[%s0 + $0x50] sm:$0xff]
    %v33 = vld [vmem:[%s0 + $0x58] sm:$0xff]
    %v34 = vld [vmem:[%s0 + $0x60] sm:$0xff]
    %v35 = vld [vmem:[%s0 + $0x68] sm:$0xff]
    %v36 = vld [vmem:[%s0 + $0x70] sm:$0xff]
    %v37 = vld [vmem:[%s0 + $0x78] sm:$0xff]
    %vm38 = vcmp.ge.f32.partialorder %v22, 0.0
    %vm39 = vcmp.ge.f32.partialorder %v23, 0.0
    %vm40 = vcmp.ge.f32.partialorder %v24, 0.0
    %vm41 = vcmp.ge.f32.partialorder %v25, 0.0
    %vm42 = vcmp.ge.f32.partialorder %v26, 0.0
    %vm43 = vcmp.ge.f32.partialorder %v27, 0.0
    %vm44 = vcmp.ge.f32.partialorder %v28, 0.0
    %vm45 = vcmp.ge.f32.partialorder %v29, 0.0
    %vm46 = vcmp.ge.f32.partialorder %v30, 0.0
    %vm47 = vcmp.ge.f32.partialorder %v31, 0.0
    %vm48 = vcmp.ge.f32.partialorder %v32, 0.0
    %vm49 = vcmp.ge.f32.partialorder %v33, 0.0
    %vm50 = vcmp.ge.f32.partialorder %v34, 0.0
    %vm51 = vcmp.ge.f32.partialorder %v35, 0.0
    %vm52 = vcmp.ge.f32.partialorder %v36, 0.0
    %vm53 = vcmp.ge.f32.partialorder %v37, 0.0
    %v54 = vsel %vm38, 1.0, -1.0
    %v55 = vsel %vm39, 1.0, -1.0
    %v56 = vsel %vm40, 1.0, -1.0
    %v57 = vsel %vm41, 1.0, -1.0
    %v58 = vsel %vm42, 1.0, -1.0
    %v59 = vsel %vm43, 1.0, -1.0
    %v60 = vsel %vm44, 1.0, -1.0
    %v61 = vsel %vm45, 1.0, -1.0
    %v62 = vsel %vm46, 1.0, -1.0
    %v63 = vsel %vm47, 1.0, -1.0
    %v64 = vsel %vm48, 1.0, -1.0
    %v65 = vsel %vm49, 1.0, -1.0
    %v66 = vsel %vm50, 1.0, -1.0
    %v67 = vsel %vm51, 1.0, -1.0
    %v68 = vsel %vm52, 1.0, -1.0
    %v69 = vsel %vm53, 1.0, -1.0
    %v70 = vpack.c.bf16 %v55, %v54
    %v71 = vpack.c.bf16 %v57, %v56
    %v72 = vpack.c.bf16 %v59, %v58
    %v73 = vpack.c.bf16 %v61, %v60
    %v74 = vpack.c.bf16 %v63, %v62
    %v75 = vpack.c.bf16 %v65, %v64
    %v76 = vpack.c.bf16 %v67, %v66
    %v77 = vpack.c.bf16 %v69, %v68
    %v78 = vld [vmem:[%s1] sm:$0xf]
    %v79 = vld [vmem:[%s1 + $0x4] sm:$0xf]
    %v82 = vunpack.c.l.b16 %v78
    %v83 = vunpack.c.l.b16 %v79
    %v84 = vpack.c.b16 %v83, %v82
    %vm86 = vcmask 130048
    %v88 = vsel %vm86, %v70, 0
    %v91 = vsel %vm86, %v71, 0
    %v94 = vsel %vm86, %v72, 0
    %v97 = vsel %vm86, %v73, 0
    %v100 = vsel %vm86, %v74, 0
    %v103 = vsel %vm86, %v75, 0
    %v106 = vsel %vm86, %v76, 0
    %v109 = vsel %vm86, %v77, 0
    %111 = vmatprep.subr.bf16.mxu0 0
    %112 = vmatpush1.bf16.msra.mxu0 %v84
    %113 = vmatprep.subr.bf16.mxu0 0
    %114 = vmatpush1.bf16.msra.mxu0 0
    %115 = vmatprep.subr.bf16.mxu0 0
    %116 = vmatpush1.bf16.msra.mxu0 0
    %117 = vmatprep.subr.bf16.mxu0 0
    %118 = vmatpush1.bf16.msra.mxu0 0
    %119 = vmatprep.subr.bf16.mxu0 0
    %120 = vmatpush1.bf16.msra.mxu0 0
    %121 = vmatprep.subr.bf16.mxu0 0
    %122 = vmatpush1.bf16.msra.mxu0 0
    %123 = vmatprep.subr.bf16.mxu0 0
    %124 = vmatpush1.bf16.msra.mxu0 0
    %125 = vmatprep.subr.bf16.mxu0 0
    %126 = vmatpush1.bf16.msra.mxu0 0
    %127 = vmatprep.subr.bf16.mxu0 0
    %128 = vmatpush1.bf16.msra.mxu0 0
    %129 = vmatprep.subr.bf16.mxu0 0
    %130 = vmatpush1.bf16.msra.mxu0 0
    %131 = vmatprep.subr.bf16.mxu0 0
    %132 = vmatpush1.bf16.msra.mxu0 0
    %133 = vmatprep.subr.bf16.mxu0 0
    %134 = vmatpush1.bf16.msra.mxu0 0
    %135 = vmatprep.subr.bf16.mxu0 0
    %136 = vmatpush1.bf16.msra.mxu0 0
    %137 = vmatprep.subr.bf16.mxu0 0
    %138 = vmatpush1.bf16.msra.mxu0 0
    %139 = vmatprep.subr.bf16.mxu0 0
    %140 = vmatpush1.bf16.msra.mxu0 0
    %141 = vmatprep.subr.bf16.mxu0 0
    %142 = vmatpush1.bf16.msra.mxu0 0
    %143 = vmatprep.mubr.bf16.mxu0 0
    %144 = vmatmul.mubr.bf16.gmra.mrb[0].mxu0 %v88
    %v145 = vpop.f32.mrb[0].mxu0
    %v146 = vadd.f32 0.0, %v145
    %v147 = vpop.f32.mrb[0].mxu0
    %v148 = vpop.f32.mrb[0].mxu0
    %v149 = vadd.f32 0.0, %v148
    %v150 = vpop.f32.mrb[0].mxu0
    %151 = vmatprep.mubr.bf16.mxu0 0
    %152 = vmatmul.mubr.bf16.gmra.mrb[0].mxu0 %v91
    %v153 = vpop.f32.mrb[0].mxu0
    %v154 = vadd.f32 0.0, %v153
    %v155 = vpop.f32.mrb[0].mxu0
    %v156 = vpop.f32.mrb[0].mxu0
    %v157 = vadd.f32 0.0, %v156
    %v158 = vpop.f32.mrb[0].mxu0
    %159 = vmatprep.mubr.bf16.mxu0 0
    %160 = vmatmul.mubr.bf16.gmra.mrb[0].mxu0 %v94
    %v161 = vpop.f32.mrb[0].mxu0
    %v162 = vadd.f32 0.0, %v161
    %v163 = vpop.f32.mrb[0].mxu0
    %v164 = vpop.f32.mrb[0].mxu0
    %v165 = vadd.f32 0.0, %v164
    %v166 = vpop.f32.mrb[0].mxu0
    %167 = vmatprep.mubr.bf16.mxu0 0
    %168 = vmatmul.mubr.bf16.gmra.mrb[0].mxu0 %v97
    %v169 = vpop.f32.mrb[0].mxu0
    %v170 = vadd.f32 0.0, %v169
    %v171 = vpop.f32.mrb[0].mxu0
    %v172 = vpop.f32.mrb[0].mxu0
    %v173 = vadd.f32 0.0, %v172
    %v174 = vpop.f32.mrb[0].mxu0
    %175 = vmatprep.mubr.bf16.mxu0 0
    %176 = vmatmul.mubr.bf16.gmra.mrb[0].mxu0 %v100
    %v177 = vpop.f32.mrb[0].mxu0
    %v178 = vadd.f32 0.0, %v177
    %v179 = vpop.f32.mrb[0].mxu0
    %v180 = vpop.f32.mrb[0].mxu0
    %v181 = vadd.f32 0.0, %v180
    %v182 = vpop.f32.mrb[0].mxu0
    %183 = vmatprep.mubr.bf16.mxu0 0
    %184 = vmatmul.mubr.bf16.gmra.mrb[0].mxu0 %v103
    %v185 = vpop.f32.mrb[0].mxu0
    %v186 = vadd.f32 0.0, %v185
    %v187 = vpop.f32.mrb[0].mxu0
    %v188 = vpop.f32.mrb[0].mxu0
    %v189 = vadd.f32 0.0, %v188
    %v190 = vpop.f32.mrb[0].mxu0
    %191 = vmatprep.mubr.bf16.mxu0 0
    %192 = vmatmul.mubr.bf16.gmra.mrb[0].mxu0 %v106
    %v193 = vpop.f32.mrb[0].mxu0
    %v194 = vadd.f32 0.0, %v193
    %v195 = vpop.f32.mrb[0].mxu0
    %v196 = vpop.f32.mrb[0].mxu0
    %v197 = vadd.f32 0.0, %v196
    %v198 = vpop.f32.mrb[0].mxu0
    %199 = vmatprep.mubr.bf16.mxu0 0
    %200 = vmatmul.mubr.bf16.gmra.mrb[0].mxu0 %v109
    %v201 = vpop.f32.mrb[0].mxu0
    %v202 = vadd.f32 0.0, %v201
    %v203 = vpop.f32.mrb[0].mxu0
    %v204 = vpop.f32.mrb[0].mxu0
    %v205 = vadd.f32 0.0, %v204
    %v206 = vpop.f32.mrb[0].mxu0
    %207 = vdwg.mxu0
    %vm208 = vcmask 523264
    %v209 = vsel %vm208, %v146, 0.0
    %210 = vadd.xlane.f32.xlu0 %v209
    %v211 = vpop.xlane.xlu0 %210
    %v212 = vsel %vm208, %v149, 0.0
    %213 = vadd.xlane.f32.xlu0 %v212
    %v214 = vpop.xlane.xlu0 %213
    %v215 = vsel %vm208, %v154, 0.0
    %216 = vadd.xlane.f32.xlu0 %v215
    %v217 = vpop.xlane.xlu0 %216
    %v218 = vsel %vm208, %v157, 0.0
    %219 = vadd.xlane.f32.xlu0 %v218
    %v220 = vpop.xlane.xlu0 %219
    %v221 = vsel %vm208, %v162, 0.0
    %222 = vadd.xlane.f32.xlu0 %v221
    %v223 = vpop.xlane.xlu0 %222
    %v224 = vsel %vm208, %v165, 0.0
    %225 = vadd.xlane.f32.xlu0 %v224
    %v226 = vpop.xlane.xlu0 %225
    %v227 = vsel %vm208, %v170, 0.0
    %228 = vadd.xlane.f32.xlu0 %v227
    %v229 = vpop.xlane.xlu0 %228
    %v230 = vsel %vm208, %v173, 0.0
    %231 = vadd.xlane.f32.xlu0 %v230
    %v232 = vpop.xlane.xlu0 %231
    %v233 = vsel %vm208, %v178, 0.0
    %234 = vadd.xlane.f32.xlu0 %v233
    %v235 = vpop.xlane.xlu0 %234
    %v236 = vsel %vm208, %v181, 0.0
    %237 = vadd.xlane.f32.xlu0 %v236
    %v238 = vpop.xlane.xlu0 %237
    %v239 = vsel %vm208, %v186, 0.0
    %240 = vadd.xlane.f32.xlu0 %v239
    %v241 = vpop.xlane.xlu0 %240
    %v242 = vsel %vm208, %v189, 0.0
    %243 = vadd.xlane.f32.xlu0 %v242
    %v244 = vpop.xlane.xlu0 %243
    %v245 = vsel %vm208, %v194, 0.0
    %246 = vadd.xlane.f32.xlu0 %v245
    %v247 = vpop.xlane.xlu0 %246
    %v248 = vsel %vm208, %v197, 0.0
    %249 = vadd.xlane.f32.xlu0 %v248
    %v250 = vpop.xlane.xlu0 %249
    %v251 = vsel %vm208, %v202, 0.0
    %252 = vadd.xlane.f32.xlu0 %v251
    %v253 = vpop.xlane.xlu0 %252
    %v254 = vsel %vm208, %v205, 0.0
    %255 = vadd.xlane.f32.xlu0 %v254
    %v256 = vpop.xlane.xlu0 %255
    %v257 = vrcp.pop 64.0
    %v258 = vmul.f32 %v211, %v257
    %v259 = vmul.f32 %v214, %v257
    %v260 = vmul.f32 %v217, %v257
    %v261 = vmul.f32 %v220, %v257
    %v262 = vmul.f32 %v223, %v257
    %v263 = vmul.f32 %v226, %v257
    %v264 = vmul.f32 %v229, %v257
    %v265 = vmul.f32 %v232, %v257
    %v266 = vmul.f32 %v235, %v257
    %v267 = vmul.f32 %v238, %v257
    %v268 = vmul.f32 %v241, %v257
    %v269 = vmul.f32 %v244, %v257
    %v270 = vmul.f32 %v247, %v257
    %v271 = vmul.f32 %v250, %v257
    %v272 = vmul.f32 %v253, %v257
    %v273 = vmul.f32 %v256, %v257
    %v274 = vmul.f32 %v146, %v146
    %v275 = vmul.f32 %v149, %v149
    %v276 = vmul.f32 %v154, %v154
    %v277 = vmul.f32 %v157, %v157
    %v278 = vmul.f32 %v162, %v162
    %v279 = vmul.f32 %v165, %v165
    %v280 = vmul.f32 %v170, %v170
    %v281 = vmul.f32 %v173, %v173
    %v282 = vmul.f32 %v178, %v178
    %v283 = vmul.f32 %v181, %v181
    %v284 = vmul.f32 %v186, %v186
    %v285 = vmul.f32 %v189, %v189
    %v286 = vmul.f32 %v194, %v194
    %v287 = vmul.f32 %v197, %v197
    %v288 = vmul.f32 %v202, %v202
    %v289 = vmul.f32 %v205, %v205
    %v290 = vsel %vm208, %v274, 0.0
    %291 = vadd.xlane.f32.xlu0 %v290
    %v292 = vpop.xlane.xlu0 %291
    %v293 = vsel %vm208, %v275, 0.0
    %294 = vadd.xlane.f32.xlu0 %v293
    %v295 = vpop.xlane.xlu0 %294
    %v296 = vsel %vm208, %v276, 0.0
    %297 = vadd.xlane.f32.xlu0 %v296
    %v298 = vpop.xlane.xlu0 %297
    %v299 = vsel %vm208, %v277, 0.0
    %300 = vadd.xlane.f32.xlu0 %v299
    %v301 = vpop.xlane.xlu0 %300
    %v302 = vsel %vm208, %v278, 0.0
    %303 = vadd.xlane.f32.xlu0 %v302
    %v304 = vpop.xlane.xlu0 %303
    %v305 = vsel %vm208, %v279, 0.0
    %306 = vadd.xlane.f32.xlu0 %v305
    %v307 = vpop.xlane.xlu0 %306
    %v308 = vsel %vm208, %v280, 0.0
    %309 = vadd.xlane.f32.xlu0 %v308
    %v310 = vpop.xlane.xlu0 %309
    %v311 = vsel %vm208, %v281, 0.0
    %312 = vadd.xlane.f32.xlu0 %v311
    %v313 = vpop.xlane.xlu0 %312
    %v314 = vsel %vm208, %v282, 0.0
    %315 = vadd.xlane.f32.xlu0 %v314
    %v316 = vpop.xlane.xlu0 %315
    %v317 = vsel %vm208, %v283, 0.0
    %318 = vadd.xlane.f32.xlu0 %v317
    %v319 = vpop.xlane.xlu0 %318
    %v320 = vsel %vm208, %v284, 0.0
    %321 = vadd.xlane.f32.xlu0 %v320
    %v322 = vpop.xlane.xlu0 %321
    %v323 = vsel %vm208, %v285, 0.0
    %324 = vadd.xlane.f32.xlu0 %v323
    %v325 = vpop.xlane.xlu0 %324
    %v326 = vsel %vm208, %v286, 0.0
    %327 = vadd.xlane.f32.xlu0 %v326
    %v328 = vpop.xlane.xlu0 %327
    %v329 = vsel %vm208, %v287, 0.0
    %330 = vadd.xlane.f32.xlu0 %v329
    %v331 = vpop.xlane.xlu0 %330
    %v332 = vsel %vm208, %v288, 0.0
    %333 = vadd.xlane.f32.xlu0 %v332
    %v334 = vpop.xlane.xlu0 %333
    %v335 = vsel %vm208, %v289, 0.0
    %336 = vadd.xlane.f32.xlu0 %v335
    %v337 = vpop.xlane.xlu0 %336
    %v338 = vmul.f32 %v292, %v257
    %v339 = vmul.f32 %v295, %v257
    %v340 = vmul.f32 %v298, %v257
    %v341 = vmul.f32 %v301, %v257
    %v342 = vmul.f32 %v304, %v257
    %v343 = vmul.f32 %v307, %v257
    %v344 = vmul.f32 %v310, %v257
    %v345 = vmul.f32 %v313, %v257
    %v346 = vmul.f32 %v316, %v257
    %v347 = vmul.f32 %v319, %v257
    %v348 = vmul.f32 %v322, %v257
    %v349 = vmul.f32 %v325, %v257
    %v350 = vmul.f32 %v328, %v257
    %v351 = vmul.f32 %v331, %v257
    %v352 = vmul.f32 %v334, %v257
    %v353 = vmul.f32 %v337, %v257
    %v354 = vmul.f32 %v258, %v258
    %v355 = vmul.f32 %v259, %v259
    %v356 = vmul.f32 %v260, %v260
    %v357 = vmul.f32 %v261, %v261
    %v358 = vmul.f32 %v262, %v262
    %v359 = vmul.f32 %v263, %v263
    %v360 = vmul.f32 %v264, %v264
    %v361 = vmul.f32 %v265, %v265
    %v362 = vmul.f32 %v266, %v266
    %v363 = vmul.f32 %v267, %v267
    %v364 = vmul.f32 %v268, %v268
    %v365 = vmul.f32 %v269, %v269
    %v366 = vmul.f32 %v270, %v270
    %v367 = vmul.f32 %v271, %v271
    %v368 = vmul.f32 %v272, %v272
    %v369 = vmul.f32 %v273, %v273
    %v370 = vsub.f32 %v338, %v354
    %v371 = vsub.f32 %v339, %v355
    %v372 = vsub.f32 %v340, %v356
    %v373 = vsub.f32 %v341, %v357
    %v374 = vsub.f32 %v342, %v358
    %v375 = vsub.f32 %v343, %v359
    %v376 = vsub.f32 %v344, %v360
    %v377 = vsub.f32 %v345, %v361
    %v378 = vsub.f32 %v346, %v362
    %v379 = vsub.f32 %v347, %v363
    %v380 = vsub.f32 %v348, %v364
    %v381 = vsub.f32 %v349, %v365
    %v382 = vsub.f32 %v350, %v366
    %v383 = vsub.f32 %v351, %v367
    %v384 = vsub.f32 %v352, %v368
    %v385 = vsub.f32 %v353, %v369
    %v386 = vsub.f32 %v146, %v258
    %v387 = vsub.f32 %v149, %v259
    %v388 = vsub.f32 %v154, %v260
    %v389 = vsub.f32 %v157, %v261
    %v390 = vsub.f32 %v162, %v262
    %v391 = vsub.f32 %v165, %v263
    %v392 = vsub.f32 %v170, %v264
    %v393 = vsub.f32 %v173, %v265
    %v394 = vsub.f32 %v178, %v266
    %v395 = vsub.f32 %v181, %v267
    %v396 = vsub.f32 %v186, %v268
    %v397 = vsub.f32 %v189, %v269
    %v398 = vsub.f32 %v194, %v270
    %v399 = vsub.f32 %v197, %v271
    %v400 = vsub.f32 %v202, %v272
    %v401 = vsub.f32 %v205, %v273
    %v402 = vadd.f32 %v370, 1e-05
    %v403 = vadd.f32 %v371, 1e-05
    %v404 = vadd.f32 %v372, 1e-05
    %v405 = vadd.f32 %v373, 1e-05
    %v406 = vadd.f32 %v374, 1e-05
    %v407 = vadd.f32 %v375, 1e-05
    %v408 = vadd.f32 %v376, 1e-05
    %v409 = vadd.f32 %v377, 1e-05
    %v410 = vadd.f32 %v378, 1e-05
    %v411 = vadd.f32 %v379, 1e-05
    %v412 = vadd.f32 %v380, 1e-05
    %v413 = vadd.f32 %v381, 1e-05
    %v414 = vadd.f32 %v382, 1e-05
    %v415 = vadd.f32 %v383, 1e-05
    %v416 = vadd.f32 %v384, 1e-05
    %v417 = vadd.f32 %v385, 1e-05
    %v418 = vrsqrt.pop %v402
    %v419 = vrsqrt.pop %v403
    %v420 = vrsqrt.pop %v404
    %v421 = vrsqrt.pop %v405
    %v422 = vrsqrt.pop %v406
    %v423 = vrsqrt.pop %v407
    %v424 = vrsqrt.pop %v408
    %v425 = vrsqrt.pop %v409
    %v426 = vrsqrt.pop %v410
    %v427 = vrsqrt.pop %v411
    %v428 = vrsqrt.pop %v412
    %v429 = vrsqrt.pop %v413
    %v430 = vrsqrt.pop %v414
    %v431 = vrsqrt.pop %v415
    %v432 = vrsqrt.pop %v416
    %v433 = vrsqrt.pop %v417
    %v434 = vmul.f32 %v386, %v418
    %v435 = vmul.f32 %v387, %v419
    %v436 = vmul.f32 %v388, %v420
    %v437 = vmul.f32 %v389, %v421
    %v438 = vmul.f32 %v390, %v422
    %v439 = vmul.f32 %v391, %v423
    %v440 = vmul.f32 %v392, %v424
    %v441 = vmul.f32 %v393, %v425
    %v442 = vmul.f32 %v394, %v426
    %v443 = vmul.f32 %v395, %v427
    %v444 = vmul.f32 %v396, %v428
    %v445 = vmul.f32 %v397, %v429
    %v446 = vmul.f32 %v398, %v430
    %v447 = vmul.f32 %v399, %v431
    %v448 = vmul.f32 %v400, %v432
    %v449 = vmul.f32 %v401, %v433
    %v450 = vmax.f32 %v434, -1.0
    %v451 = vmax.f32 %v435, -1.0
    %v452 = vmax.f32 %v436, -1.0
    %v453 = vmax.f32 %v437, -1.0
    %v454 = vmax.f32 %v438, -1.0
    %v455 = vmax.f32 %v439, -1.0
    %v456 = vmax.f32 %v440, -1.0
    %v457 = vmax.f32 %v441, -1.0
    %v458 = vmax.f32 %v442, -1.0
    %v459 = vmax.f32 %v443, -1.0
    %v460 = vmax.f32 %v444, -1.0
    %v461 = vmax.f32 %v445, -1.0
    %v462 = vmax.f32 %v446, -1.0
    %v463 = vmax.f32 %v447, -1.0
    %v464 = vmax.f32 %v448, -1.0
    %v465 = vmax.f32 %v449, -1.0
    %v466 = vmin.f32 %v450, 1.0
    %v467 = vmin.f32 %v451, 1.0
    %v468 = vmin.f32 %v452, 1.0
    %v469 = vmin.f32 %v453, 1.0
    %v470 = vmin.f32 %v454, 1.0
    %v471 = vmin.f32 %v455, 1.0
    %v472 = vmin.f32 %v456, 1.0
    %v473 = vmin.f32 %v457, 1.0
    %v474 = vmin.f32 %v458, 1.0
    %v475 = vmin.f32 %v459, 1.0
    %v476 = vmin.f32 %v460, 1.0
    %v477 = vmin.f32 %v461, 1.0
    %v478 = vmin.f32 %v462, 1.0
    %v479 = vmin.f32 %v463, 1.0
    %v480 = vmin.f32 %v464, 1.0
    %v481 = vmin.f32 %v465, 1.0
    %vm482 = vcmp.ge.f32.partialorder %v466, 0.0
    %vm483 = vcmp.ge.f32.partialorder %v467, 0.0
    %vm484 = vcmp.ge.f32.partialorder %v468, 0.0
    %vm485 = vcmp.ge.f32.partialorder %v469, 0.0
    %vm486 = vcmp.ge.f32.partialorder %v470, 0.0
    %vm487 = vcmp.ge.f32.partialorder %v471, 0.0
    %vm488 = vcmp.ge.f32.partialorder %v472, 0.0
    %vm489 = vcmp.ge.f32.partialorder %v473, 0.0
    %vm490 = vcmp.ge.f32.partialorder %v474, 0.0
    %vm491 = vcmp.ge.f32.partialorder %v475, 0.0
    %vm492 = vcmp.ge.f32.partialorder %v476, 0.0
    %vm493 = vcmp.ge.f32.partialorder %v477, 0.0
    %vm494 = vcmp.ge.f32.partialorder %v478, 0.0
    %vm495 = vcmp.ge.f32.partialorder %v479, 0.0
    %vm496 = vcmp.ge.f32.partialorder %v480, 0.0
    %vm497 = vcmp.ge.f32.partialorder %v481, 0.0
    %v498 = vsel %vm482, 1.0, -1.0
    %v499 = vsel %vm483, 1.0, -1.0
    %v500 = vsel %vm484, 1.0, -1.0
    %v501 = vsel %vm485, 1.0, -1.0
    %v502 = vsel %vm486, 1.0, -1.0
    %v503 = vsel %vm487, 1.0, -1.0
    %v504 = vsel %vm488, 1.0, -1.0
    %v505 = vsel %vm489, 1.0, -1.0
    %v506 = vsel %vm490, 1.0, -1.0
    %v507 = vsel %vm491, 1.0, -1.0
    %v508 = vsel %vm492, 1.0, -1.0
    %v509 = vsel %vm493, 1.0, -1.0
    %v510 = vsel %vm494, 1.0, -1.0
    %v511 = vsel %vm495, 1.0, -1.0
    %v512 = vsel %vm496, 1.0, -1.0
    %v513 = vsel %vm497, 1.0, -1.0
    %v514 = vpack.c.bf16 %v499, %v498
    %v515 = vpack.c.bf16 %v501, %v500
    %v516 = vpack.c.bf16 %v503, %v502
    %v517 = vpack.c.bf16 %v505, %v504
    %v518 = vpack.c.bf16 %v507, %v506
    %v519 = vpack.c.bf16 %v509, %v508
    %v520 = vpack.c.bf16 %v511, %v510
    %v521 = vpack.c.bf16 %v513, %v512
    %v522 = vld [vmem:[%s2] sm:$0xf]
    %v523 = vld [vmem:[%s2 + $0x4] sm:$0xf]
    %v524 = vld [vmem:[%s2 + $0x8] sm:$0xf]
    %v525 = vld [vmem:[%s2 + $0xc] sm:$0xf]
    %v526 = vld [vmem:[%s2 + $0x10] sm:$0xf]
    %v527 = vld [vmem:[%s2 + $0x14] sm:$0xf]
    %v528 = vld [vmem:[%s2 + $0x18] sm:$0xf]
    %v529 = vld [vmem:[%s2 + $0x1c] sm:$0xf]
    %v538 = vunpack.c.l.b16 %v522
    %v539 = vunpack.c.l.b16 %v523
    %v540 = vunpack.c.l.b16 %v524
    %v541 = vunpack.c.l.b16 %v525
    %v542 = vunpack.c.l.b16 %v526
    %v543 = vunpack.c.l.b16 %v527
    %v544 = vunpack.c.l.b16 %v528
    %v545 = vunpack.c.l.b16 %v529
    %v546 = vpack.c.b16 %v539, %v538
    %v547 = vpack.c.b16 %v541, %v540
    %v548 = vpack.c.b16 %v543, %v542
    %v549 = vpack.c.b16 %v545, %v544
    %v555 = vsel %vm208, %v514, 0
    %v558 = vsel %vm208, %v515, 0
    %v561 = vsel %vm208, %v516, 0
    %v564 = vsel %vm208, %v517, 0
    %v567 = vsel %vm208, %v518, 0
    %v570 = vsel %vm208, %v519, 0
    %v573 = vsel %vm208, %v520, 0
    %v576 = vsel %vm208, %v521, 0
    %578 = vmatprep.subr.bf16.mxu0 0
    %579 = vmatpush1.bf16.msra.mxu0 %v546
    %580 = vmatprep.subr.bf16.mxu0 0
    %581 = vmatpush1.bf16.msra.mxu0 %v547
    %582 = vmatprep.subr.bf16.mxu0 0
    %583 = vmatpush1.bf16.msra.mxu0 %v548
    %584 = vmatprep.subr.bf16.mxu0 0
    %585 = vmatpush1.bf16.msra.mxu0 %v549
    %586 = vmatprep.subr.bf16.mxu0 0
    %587 = vmatpush1.bf16.msra.mxu0 0
    %588 = vmatprep.subr.bf16.mxu0 0
    %589 = vmatpush1.bf16.msra.mxu0 0
    %590 = vmatprep.subr.bf16.mxu0 0
    %591 = vmatpush1.bf16.msra.mxu0 0
    %592 = vmatprep.subr.bf16.mxu0 0
    %593 = vmatpush1.bf16.msra.mxu0 0
    %594 = vmatprep.subr.bf16.mxu0 0
    %595 = vmatpush1.bf16.msra.mxu0 0
    %596 = vmatprep.subr.bf16.mxu0 0
    %597 = vmatpush1.bf16.msra.mxu0 0
    %598 = vmatprep.subr.bf16.mxu0 0
    %599 = vmatpush1.bf16.msra.mxu0 0
    %600 = vmatprep.subr.bf16.mxu0 0
    %601 = vmatpush1.bf16.msra.mxu0 0
    %602 = vmatprep.subr.bf16.mxu0 0
    %603 = vmatpush1.bf16.msra.mxu0 0
    %604 = vmatprep.subr.bf16.mxu0 0
    %605 = vmatpush1.bf16.msra.mxu0 0
    %606 = vmatprep.subr.bf16.mxu0 0
    %607 = vmatpush1.bf16.msra.mxu0 0
    %608 = vmatprep.subr.bf16.mxu0 0
    %609 = vmatpush1.bf16.msra.mxu0 0
    %610 = vmatprep.mubr.bf16.mxu0 0
    %611 = vmatmul.mubr.bf16.gmra.mrb[0].mxu0 %v555
    %v612 = vpop.f32.mrb[0].mxu0
    %v613 = vadd.f32 0.0, %v612
    %v614 = vpop.f32.mrb[0].mxu0
    %v615 = vpop.f32.mrb[0].mxu0
    %v616 = vadd.f32 0.0, %v615
    %v617 = vpop.f32.mrb[0].mxu0
    %618 = vmatprep.mubr.bf16.mxu0 0
    %619 = vmatmul.mubr.bf16.gmra.mrb[0].mxu0 %v558
    %v620 = vpop.f32.mrb[0].mxu0
    %v621 = vadd.f32 0.0, %v620
    %v622 = vpop.f32.mrb[0].mxu0
    %v623 = vpop.f32.mrb[0].mxu0
    %v624 = vadd.f32 0.0, %v623
    %v625 = vpop.f32.mrb[0].mxu0
    %626 = vmatprep.mubr.bf16.mxu0 0
    %627 = vmatmul.mubr.bf16.gmra.mrb[0].mxu0 %v561
    %v628 = vpop.f32.mrb[0].mxu0
    %v629 = vadd.f32 0.0, %v628
    %v630 = vpop.f32.mrb[0].mxu0
    %v631 = vpop.f32.mrb[0].mxu0
    %v632 = vadd.f32 0.0, %v631
    %v633 = vpop.f32.mrb[0].mxu0
    %634 = vmatprep.mubr.bf16.mxu0 0
    %635 = vmatmul.mubr.bf16.gmra.mrb[0].mxu0 %v564
    %v636 = vpop.f32.mrb[0].mxu0
    %v637 = vadd.f32 0.0, %v636
    %v638 = vpop.f32.mrb[0].mxu0
    %v639 = vpop.f32.mrb[0].mxu0
    %v640 = vadd.f32 0.0, %v639
    %v641 = vpop.f32.mrb[0].mxu0
    %642 = vmatprep.mubr.bf16.mxu0 0
    %643 = vmatmul.mubr.bf16.gmra.mrb[0].mxu0 %v567
    %v644 = vpop.f32.mrb[0].mxu0
    %v645 = vadd.f32 0.0, %v644
    %v646 = vpop.f32.mrb[0].mxu0
    %v647 = vpop.f32.mrb[0].mxu0
    %v648 = vadd.f32 0.0, %v647
    %v649 = vpop.f32.mrb[0].mxu0
    %650 = vmatprep.mubr.bf16.mxu0 0
    %651 = vmatmul.mubr.bf16.gmra.mrb[0].mxu0 %v570
    %v652 = vpop.f32.mrb[0].mxu0
    %v653 = vadd.f32 0.0, %v652
    %v654 = vpop.f32.mrb[0].mxu0
    %v655 = vpop.f32.mrb[0].mxu0
    %v656 = vadd.f32 0.0, %v655
    %v657 = vpop.f32.mrb[0].mxu0
    %658 = vmatprep.mubr.bf16.mxu0 0
    %659 = vmatmul.mubr.bf16.gmra.mrb[0].mxu0 %v573
    %v660 = vpop.f32.mrb[0].mxu0
    %v661 = vadd.f32 0.0, %v660
    %v662 = vpop.f32.mrb[0].mxu0
    %v663 = vpop.f32.mrb[0].mxu0
    %v664 = vadd.f32 0.0, %v663
    %v665 = vpop.f32.mrb[0].mxu0
    %666 = vmatprep.mubr.bf16.mxu0 0
    %667 = vmatmul.mubr.bf16.gmra.mrb[0].mxu0 %v576
    %v668 = vpop.f32.mrb[0].mxu0
    %v669 = vadd.f32 0.0, %v668
    %v670 = vpop.f32.mrb[0].mxu0
    %v671 = vpop.f32.mrb[0].mxu0
    %v672 = vadd.f32 0.0, %v671
    %v673 = vpop.f32.mrb[0].mxu0
    %674 = vdwg.mxu0
    %v675 = vsel %vm208, %v613, 0.0
    %676 = vadd.xlane.f32.xlu0 %v675
    %v677 = vpop.xlane.xlu0 %676
    %v678 = vsel %vm208, %v616, 0.0
    %679 = vadd.xlane.f32.xlu0 %v678
    %v680 = vpop.xlane.xlu0 %679
    %v681 = vsel %vm208, %v621, 0.0
    %682 = vadd.xlane.f32.xlu0 %v681
    %v683 = vpop.xlane.xlu0 %682
    %v684 = vsel %vm208, %v624, 0.0
    %685 = vadd.xlane.f32.xlu0 %v684
    %v686 = vpop.xlane.xlu0 %685
    %v687 = vsel %vm208, %v629, 0.0
    %688 = vadd.xlane.f32.xlu0 %v687
    %v689 = vpop.xlane.xlu0 %688
    %v690 = vsel %vm208, %v632, 0.0
    %691 = vadd.xlane.f32.xlu0 %v690
    %v692 = vpop.xlane.xlu0 %691
    %v693 = vsel %vm208, %v637, 0.0
    %694 = vadd.xlane.f32.xlu0 %v693
    %v695 = vpop.xlane.xlu0 %694
    %v696 = vsel %vm208, %v640, 0.0
    %697 = vadd.xlane.f32.xlu0 %v696
    %v698 = vpop.xlane.xlu0 %697
    %v699 = vsel %vm208, %v645, 0.0
    %700 = vadd.xlane.f32.xlu0 %v699
    %v701 = vpop.xlane.xlu0 %700
    %v702 = vsel %vm208, %v648, 0.0
    %703 = vadd.xlane.f32.xlu0 %v702
    %v704 = vpop.xlane.xlu0 %703
    %v705 = vsel %vm208, %v653, 0.0
    %706 = vadd.xlane.f32.xlu0 %v705
    %v707 = vpop.xlane.xlu0 %706
    %v708 = vsel %vm208, %v656, 0.0
    %709 = vadd.xlane.f32.xlu0 %v708
    %v710 = vpop.xlane.xlu0 %709
    %v711 = vsel %vm208, %v661, 0.0
    %712 = vadd.xlane.f32.xlu0 %v711
    %v713 = vpop.xlane.xlu0 %712
    %v714 = vsel %vm208, %v664, 0.0
    %715 = vadd.xlane.f32.xlu0 %v714
    %v716 = vpop.xlane.xlu0 %715
    %v717 = vsel %vm208, %v669, 0.0
    %718 = vadd.xlane.f32.xlu0 %v717
    %v719 = vpop.xlane.xlu0 %718
    %v720 = vsel %vm208, %v672, 0.0
    %721 = vadd.xlane.f32.xlu0 %v720
    %v722 = vpop.xlane.xlu0 %721
    %v723 = vmul.f32 %v677, %v257
    %v724 = vmul.f32 %v680, %v257
    %v725 = vmul.f32 %v683, %v257
    %v726 = vmul.f32 %v686, %v257
    %v727 = vmul.f32 %v689, %v257
    %v728 = vmul.f32 %v692, %v257
    %v729 = vmul.f32 %v695, %v257
    %v730 = vmul.f32 %v698, %v257
    %v731 = vmul.f32 %v701, %v257
    %v732 = vmul.f32 %v704, %v257
    %v733 = vmul.f32 %v707, %v257
    %v734 = vmul.f32 %v710, %v257
    %v735 = vmul.f32 %v713, %v257
    %v736 = vmul.f32 %v716, %v257
    %v737 = vmul.f32 %v719, %v257
    %v738 = vmul.f32 %v722, %v257
    %v739 = vmul.f32 %v613, %v613
    %v740 = vmul.f32 %v616, %v616
    %v741 = vmul.f32 %v621, %v621
    %v742 = vmul.f32 %v624, %v624
    %v743 = vmul.f32 %v629, %v629
    %v744 = vmul.f32 %v632, %v632
    %v745 = vmul.f32 %v637, %v637
    %v746 = vmul.f32 %v640, %v640
    %v747 = vmul.f32 %v645, %v645
    %v748 = vmul.f32 %v648, %v648
    %v749 = vmul.f32 %v653, %v653
    %v750 = vmul.f32 %v656, %v656
    %v751 = vmul.f32 %v661, %v661
    %v752 = vmul.f32 %v664, %v664
    %v753 = vmul.f32 %v669, %v669
    %v754 = vmul.f32 %v672, %v672
    %v755 = vsel %vm208, %v739, 0.0
    %756 = vadd.xlane.f32.xlu0 %v755
    %v757 = vpop.xlane.xlu0 %756
    %v758 = vsel %vm208, %v740, 0.0
    %759 = vadd.xlane.f32.xlu0 %v758
    %v760 = vpop.xlane.xlu0 %759
    %v761 = vsel %vm208, %v741, 0.0
    %762 = vadd.xlane.f32.xlu0 %v761
    %v763 = vpop.xlane.xlu0 %762
    %v764 = vsel %vm208, %v742, 0.0
    %765 = vadd.xlane.f32.xlu0 %v764
    %v766 = vpop.xlane.xlu0 %765
    %v767 = vsel %vm208, %v743, 0.0
    %768 = vadd.xlane.f32.xlu0 %v767
    %v769 = vpop.xlane.xlu0 %768
    %v770 = vsel %vm208, %v744, 0.0
    %771 = vadd.xlane.f32.xlu0 %v770
    %v772 = vpop.xlane.xlu0 %771
    %v773 = vsel %vm208, %v745, 0.0
    %774 = vadd.xlane.f32.xlu0 %v773
    %v775 = vpop.xlane.xlu0 %774
    %v776 = vsel %vm208, %v746, 0.0
    %777 = vadd.xlane.f32.xlu0 %v776
    %v778 = vpop.xlane.xlu0 %777
    %v779 = vsel %vm208, %v747, 0.0
    %780 = vadd.xlane.f32.xlu0 %v779
    %v781 = vpop.xlane.xlu0 %780
    %v782 = vsel %vm208, %v748, 0.0
    %783 = vadd.xlane.f32.xlu0 %v782
    %v784 = vpop.xlane.xlu0 %783
    %v785 = vsel %vm208, %v749, 0.0
    %786 = vadd.xlane.f32.xlu0 %v785
    %v787 = vpop.xlane.xlu0 %786
    %v788 = vsel %vm208, %v750, 0.0
    %789 = vadd.xlane.f32.xlu0 %v788
    %v790 = vpop.xlane.xlu0 %789
    %v791 = vsel %vm208, %v751, 0.0
    %792 = vadd.xlane.f32.xlu0 %v791
    %v793 = vpop.xlane.xlu0 %792
    %v794 = vsel %vm208, %v752, 0.0
    %795 = vadd.xlane.f32.xlu0 %v794
    %v796 = vpop.xlane.xlu0 %795
    %v797 = vsel %vm208, %v753, 0.0
    %798 = vadd.xlane.f32.xlu0 %v797
    %v799 = vpop.xlane.xlu0 %798
    %v800 = vsel %vm208, %v754, 0.0
    %801 = vadd.xlane.f32.xlu0 %v800
    %v802 = vpop.xlane.xlu0 %801
    %v803 = vmul.f32 %v757, %v257
    %v804 = vmul.f32 %v760, %v257
    %v805 = vmul.f32 %v763, %v257
    %v806 = vmul.f32 %v766, %v257
    %v807 = vmul.f32 %v769, %v257
    %v808 = vmul.f32 %v772, %v257
    %v809 = vmul.f32 %v775, %v257
    %v810 = vmul.f32 %v778, %v257
    %v811 = vmul.f32 %v781, %v257
    %v812 = vmul.f32 %v784, %v257
    %v813 = vmul.f32 %v787, %v257
    %v814 = vmul.f32 %v790, %v257
    %v815 = vmul.f32 %v793, %v257
    %v816 = vmul.f32 %v796, %v257
    %v817 = vmul.f32 %v799, %v257
    %v818 = vmul.f32 %v802, %v257
    %v819 = vmul.f32 %v723, %v723
    %v820 = vmul.f32 %v724, %v724
    %v821 = vmul.f32 %v725, %v725
    %v822 = vmul.f32 %v726, %v726
    %v823 = vmul.f32 %v727, %v727
    %v824 = vmul.f32 %v728, %v728
    %v825 = vmul.f32 %v729, %v729
    %v826 = vmul.f32 %v730, %v730
    %v827 = vmul.f32 %v731, %v731
    %v828 = vmul.f32 %v732, %v732
    %v829 = vmul.f32 %v733, %v733
    %v830 = vmul.f32 %v734, %v734
    %v831 = vmul.f32 %v735, %v735
    %v832 = vmul.f32 %v736, %v736
    %v833 = vmul.f32 %v737, %v737
    %v834 = vmul.f32 %v738, %v738
    %v835 = vsub.f32 %v803, %v819
    %v836 = vsub.f32 %v804, %v820
    %v837 = vsub.f32 %v805, %v821
    %v838 = vsub.f32 %v806, %v822
    %v839 = vsub.f32 %v807, %v823
    %v840 = vsub.f32 %v808, %v824
    %v841 = vsub.f32 %v809, %v825
    %v842 = vsub.f32 %v810, %v826
    %v843 = vsub.f32 %v811, %v827
    %v844 = vsub.f32 %v812, %v828
    %v845 = vsub.f32 %v813, %v829
    %v846 = vsub.f32 %v814, %v830
    %v847 = vsub.f32 %v815, %v831
    %v848 = vsub.f32 %v816, %v832
    %v849 = vsub.f32 %v817, %v833
    %v850 = vsub.f32 %v818, %v834
    %v851 = vsub.f32 %v613, %v723
    %v852 = vsub.f32 %v616, %v724
    %v853 = vsub.f32 %v621, %v725
    %v854 = vsub.f32 %v624, %v726
    %v855 = vsub.f32 %v629, %v727
    %v856 = vsub.f32 %v632, %v728
    %v857 = vsub.f32 %v637, %v729
    %v858 = vsub.f32 %v640, %v730
    %v859 = vsub.f32 %v645, %v731
    %v860 = vsub.f32 %v648, %v732
    %v861 = vsub.f32 %v653, %v733
    %v862 = vsub.f32 %v656, %v734
    %v863 = vsub.f32 %v661, %v735
    %v864 = vsub.f32 %v664, %v736
    %v865 = vsub.f32 %v669, %v737
    %v866 = vsub.f32 %v672, %v738
    %v867 = vadd.f32 %v835, 1e-05
    %v868 = vadd.f32 %v836, 1e-05
    %v869 = vadd.f32 %v837, 1e-05
    %v870 = vadd.f32 %v838, 1e-05
    %v871 = vadd.f32 %v839, 1e-05
    %v872 = vadd.f32 %v840, 1e-05
    %v873 = vadd.f32 %v841, 1e-05
    %v874 = vadd.f32 %v842, 1e-05
    %v875 = vadd.f32 %v843, 1e-05
    %v876 = vadd.f32 %v844, 1e-05
    %v877 = vadd.f32 %v845, 1e-05
    %v878 = vadd.f32 %v846, 1e-05
    %v879 = vadd.f32 %v847, 1e-05
    %v880 = vadd.f32 %v848, 1e-05
    %v881 = vadd.f32 %v849, 1e-05
    %v882 = vadd.f32 %v850, 1e-05
    %v883 = vrsqrt.pop %v867
    %v884 = vrsqrt.pop %v868
    %v885 = vrsqrt.pop %v869
    %v886 = vrsqrt.pop %v870
    %v887 = vrsqrt.pop %v871
    %v888 = vrsqrt.pop %v872
    %v889 = vrsqrt.pop %v873
    %v890 = vrsqrt.pop %v874
    %v891 = vrsqrt.pop %v875
    %v892 = vrsqrt.pop %v876
    %v893 = vrsqrt.pop %v877
    %v894 = vrsqrt.pop %v878
    %v895 = vrsqrt.pop %v879
    %v896 = vrsqrt.pop %v880
    %v897 = vrsqrt.pop %v881
    %v898 = vrsqrt.pop %v882
    %v899 = vmul.f32 %v851, %v883
    %v900 = vmul.f32 %v852, %v884
    %v901 = vmul.f32 %v853, %v885
    %v902 = vmul.f32 %v854, %v886
    %v903 = vmul.f32 %v855, %v887
    %v904 = vmul.f32 %v856, %v888
    %v905 = vmul.f32 %v857, %v889
    %v906 = vmul.f32 %v858, %v890
    %v907 = vmul.f32 %v859, %v891
    %v908 = vmul.f32 %v860, %v892
    %v909 = vmul.f32 %v861, %v893
    %v910 = vmul.f32 %v862, %v894
    %v911 = vmul.f32 %v863, %v895
    %v912 = vmul.f32 %v864, %v896
    %v913 = vmul.f32 %v865, %v897
    %v914 = vmul.f32 %v866, %v898
    %v915 = vmax.f32 %v899, -1.0
    %v916 = vmax.f32 %v900, -1.0
    %v917 = vmax.f32 %v901, -1.0
    %v918 = vmax.f32 %v902, -1.0
    %v919 = vmax.f32 %v903, -1.0
    %v920 = vmax.f32 %v904, -1.0
    %v921 = vmax.f32 %v905, -1.0
    %v922 = vmax.f32 %v906, -1.0
    %v923 = vmax.f32 %v907, -1.0
    %v924 = vmax.f32 %v908, -1.0
    %v925 = vmax.f32 %v909, -1.0
    %v926 = vmax.f32 %v910, -1.0
    %v927 = vmax.f32 %v911, -1.0
    %v928 = vmax.f32 %v912, -1.0
    %v929 = vmax.f32 %v913, -1.0
    %v930 = vmax.f32 %v914, -1.0
    %v931 = vmin.f32 %v915, 1.0
    %v932 = vmin.f32 %v916, 1.0
    %v933 = vmin.f32 %v917, 1.0
    %v934 = vmin.f32 %v918, 1.0
    %v935 = vmin.f32 %v919, 1.0
    %v936 = vmin.f32 %v920, 1.0
    %v937 = vmin.f32 %v921, 1.0
    %v938 = vmin.f32 %v922, 1.0
    %v939 = vmin.f32 %v923, 1.0
    %v940 = vmin.f32 %v924, 1.0
    %v941 = vmin.f32 %v925, 1.0
    %v942 = vmin.f32 %v926, 1.0
    %v943 = vmin.f32 %v927, 1.0
    %v944 = vmin.f32 %v928, 1.0
    %v945 = vmin.f32 %v929, 1.0
    %v946 = vmin.f32 %v930, 1.0
    %vm947 = vcmp.ge.f32.partialorder %v931, 0.0
    %vm948 = vcmp.ge.f32.partialorder %v932, 0.0
    %vm949 = vcmp.ge.f32.partialorder %v933, 0.0
    %vm950 = vcmp.ge.f32.partialorder %v934, 0.0
    %vm951 = vcmp.ge.f32.partialorder %v935, 0.0
    %vm952 = vcmp.ge.f32.partialorder %v936, 0.0
    %vm953 = vcmp.ge.f32.partialorder %v937, 0.0
    %vm954 = vcmp.ge.f32.partialorder %v938, 0.0
    %vm955 = vcmp.ge.f32.partialorder %v939, 0.0
    %vm956 = vcmp.ge.f32.partialorder %v940, 0.0
    %vm957 = vcmp.ge.f32.partialorder %v941, 0.0
    %vm958 = vcmp.ge.f32.partialorder %v942, 0.0
    %vm959 = vcmp.ge.f32.partialorder %v943, 0.0
    %vm960 = vcmp.ge.f32.partialorder %v944, 0.0
    %vm961 = vcmp.ge.f32.partialorder %v945, 0.0
    %vm962 = vcmp.ge.f32.partialorder %v946, 0.0
    %v963 = vsel %vm947, 1.0, -1.0
    %v964 = vsel %vm948, 1.0, -1.0
    %v965 = vsel %vm949, 1.0, -1.0
    %v966 = vsel %vm950, 1.0, -1.0
    %v967 = vsel %vm951, 1.0, -1.0
    %v968 = vsel %vm952, 1.0, -1.0
    %v969 = vsel %vm953, 1.0, -1.0
    %v970 = vsel %vm954, 1.0, -1.0
    %v971 = vsel %vm955, 1.0, -1.0
    %v972 = vsel %vm956, 1.0, -1.0
    %v973 = vsel %vm957, 1.0, -1.0
    %v974 = vsel %vm958, 1.0, -1.0
    %v975 = vsel %vm959, 1.0, -1.0
    %v976 = vsel %vm960, 1.0, -1.0
    %v977 = vsel %vm961, 1.0, -1.0
    %v978 = vsel %vm962, 1.0, -1.0
    %v979 = vpack.c.bf16 %v964, %v963
    %v980 = vpack.c.bf16 %v966, %v965
    %v981 = vpack.c.bf16 %v968, %v967
    %v982 = vpack.c.bf16 %v970, %v969
    %v983 = vpack.c.bf16 %v972, %v971
    %v984 = vpack.c.bf16 %v974, %v973
    %v985 = vpack.c.bf16 %v976, %v975
    %v986 = vpack.c.bf16 %v978, %v977
    %v987 = vld [vmem:[%s3] sm:$0xf]
    %v988 = vld [vmem:[%s3 + $0x4] sm:$0xf]
    %v989 = vld [vmem:[%s3 + $0x8] sm:$0xf]
    %v990 = vld [vmem:[%s3 + $0xc] sm:$0xf]
    %v991 = vld [vmem:[%s3 + $0x10] sm:$0xf]
    %v992 = vld [vmem:[%s3 + $0x14] sm:$0xf]
    %v993 = vld [vmem:[%s3 + $0x18] sm:$0xf]
    %v994 = vld [vmem:[%s3 + $0x1c] sm:$0xf]
    %v1003 = vunpack.c.l.b16 %v987
    %v1004 = vunpack.c.l.b16 %v988
    %v1005 = vunpack.c.l.b16 %v989
    %v1006 = vunpack.c.l.b16 %v990
    %v1007 = vunpack.c.l.b16 %v991
    %v1008 = vunpack.c.l.b16 %v992
    %v1009 = vunpack.c.l.b16 %v993
    %v1010 = vunpack.c.l.b16 %v994
    %v1011 = vpack.c.b16 %v1004, %v1003
    %v1012 = vpack.c.b16 %v1006, %v1005
    %v1013 = vpack.c.b16 %v1008, %v1007
    %v1014 = vpack.c.b16 %v1010, %v1009
    %v1020 = vsel %vm208, %v979, 0
    %v1023 = vsel %vm208, %v980, 0
    %v1026 = vsel %vm208, %v981, 0
    %v1029 = vsel %vm208, %v982, 0
    %v1032 = vsel %vm208, %v983, 0
    %v1035 = vsel %vm208, %v984, 0
    %v1038 = vsel %vm208, %v985, 0
    %v1041 = vsel %vm208, %v986, 0
    %1043 = vmatprep.subr.bf16.mxu0 0
    %1044 = vmatpush1.bf16.msra.mxu0 %v1011
    %1045 = vmatprep.subr.bf16.mxu0 0
    %1046 = vmatpush1.bf16.msra.mxu0 %v1012
    %1047 = vmatprep.subr.bf16.mxu0 0
    %1048 = vmatpush1.bf16.msra.mxu0 %v1013
    %1049 = vmatprep.subr.bf16.mxu0 0
    %1050 = vmatpush1.bf16.msra.mxu0 %v1014
    %1051 = vmatprep.subr.bf16.mxu0 0
    %1052 = vmatpush1.bf16.msra.mxu0 0
    %1053 = vmatprep.subr.bf16.mxu0 0
    %1054 = vmatpush1.bf16.msra.mxu0 0
    %1055 = vmatprep.subr.bf16.mxu0 0
    %1056 = vmatpush1.bf16.msra.mxu0 0
    %1057 = vmatprep.subr.bf16.mxu0 0
    %1058 = vmatpush1.bf16.msra.mxu0 0
    %1059 = vmatprep.subr.bf16.mxu0 0
    %1060 = vmatpush1.bf16.msra.mxu0 0
    %1061 = vmatprep.subr.bf16.mxu0 0
    %1062 = vmatpush1.bf16.msra.mxu0 0
    %1063 = vmatprep.subr.bf16.mxu0 0
    %1064 = vmatpush1.bf16.msra.mxu0 0
    %1065 = vmatprep.subr.bf16.mxu0 0
    %1066 = vmatpush1.bf16.msra.mxu0 0
    %1067 = vmatprep.subr.bf16.mxu0 0
    %1068 = vmatpush1.bf16.msra.mxu0 0
    %1069 = vmatprep.subr.bf16.mxu0 0
    %1070 = vmatpush1.bf16.msra.mxu0 0
    %1071 = vmatprep.subr.bf16.mxu0 0
    %1072 = vmatpush1.bf16.msra.mxu0 0
    %1073 = vmatprep.subr.bf16.mxu0 0
    %1074 = vmatpush1.bf16.msra.mxu0 0
    %1075 = vmatprep.mubr.bf16.mxu0 0
    %1076 = vmatmul.mubr.bf16.gmra.mrb[0].mxu0 %v1020
    %v1077 = vpop.f32.mrb[0].mxu0
    %v1078 = vadd.f32 0.0, %v1077
    %v1079 = vpop.f32.mrb[0].mxu0
    %v1080 = vpop.f32.mrb[0].mxu0
    %v1081 = vadd.f32 0.0, %v1080
    %v1082 = vpop.f32.mrb[0].mxu0
    %1083 = vmatprep.mubr.bf16.mxu0 0
    %1084 = vmatmul.mubr.bf16.gmra.mrb[0].mxu0 %v1023
    %v1085 = vpop.f32.mrb[0].mxu0
    %v1086 = vadd.f32 0.0, %v1085
    %v1087 = vpop.f32.mrb[0].mxu0
    %v1088 = vpop.f32.mrb[0].mxu0
    %v1089 = vadd.f32 0.0, %v1088
    %v1090 = vpop.f32.mrb[0].mxu0
    %1091 = vmatprep.mubr.bf16.mxu0 0
    %1092 = vmatmul.mubr.bf16.gmra.mrb[0].mxu0 %v1026
    %v1093 = vpop.f32.mrb[0].mxu0
    %v1094 = vadd.f32 0.0, %v1093
    %v1095 = vpop.f32.mrb[0].mxu0
    %v1096 = vpop.f32.mrb[0].mxu0
    %v1097 = vadd.f32 0.0, %v1096
    %v1098 = vpop.f32.mrb[0].mxu0
    %1099 = vmatprep.mubr.bf16.mxu0 0
    %1100 = vmatmul.mubr.bf16.gmra.mrb[0].mxu0 %v1029
    %v1101 = vpop.f32.mrb[0].mxu0
    %v1102 = vadd.f32 0.0, %v1101
    %v1103 = vpop.f32.mrb[0].mxu0
    %v1104 = vpop.f32.mrb[0].mxu0
    %v1105 = vadd.f32 0.0, %v1104
    %v1106 = vpop.f32.mrb[0].mxu0
    %1107 = vmatprep.mubr.bf16.mxu0 0
    %1108 = vmatmul.mubr.bf16.gmra.mrb[0].mxu0 %v1032
    %v1109 = vpop.f32.mrb[0].mxu0
    %v1110 = vadd.f32 0.0, %v1109
    %v1111 = vpop.f32.mrb[0].mxu0
    %v1112 = vpop.f32.mrb[0].mxu0
    %v1113 = vadd.f32 0.0, %v1112
    %v1114 = vpop.f32.mrb[0].mxu0
    %1115 = vmatprep.mubr.bf16.mxu0 0
    %1116 = vmatmul.mubr.bf16.gmra.mrb[0].mxu0 %v1035
    %v1117 = vpop.f32.mrb[0].mxu0
    %v1118 = vadd.f32 0.0, %v1117
    %v1119 = vpop.f32.mrb[0].mxu0
    %v1120 = vpop.f32.mrb[0].mxu0
    %v1121 = vadd.f32 0.0, %v1120
    %v1122 = vpop.f32.mrb[0].mxu0
    %1123 = vmatprep.mubr.bf16.mxu0 0
    %1124 = vmatmul.mubr.bf16.gmra.mrb[0].mxu0 %v1038
    %v1125 = vpop.f32.mrb[0].mxu0
    %v1126 = vadd.f32 0.0, %v1125
    %v1127 = vpop.f32.mrb[0].mxu0
    %v1128 = vpop.f32.mrb[0].mxu0
    %v1129 = vadd.f32 0.0, %v1128
    %v1130 = vpop.f32.mrb[0].mxu0
    %1131 = vmatprep.mubr.bf16.mxu0 0
    %1132 = vmatmul.mubr.bf16.gmra.mrb[0].mxu0 %v1041
    %v1133 = vpop.f32.mrb[0].mxu0
    %v1134 = vadd.f32 0.0, %v1133
    %v1135 = vpop.f32.mrb[0].mxu0
    %v1136 = vpop.f32.mrb[0].mxu0
    %v1137 = vadd.f32 0.0, %v1136
    %v1138 = vpop.f32.mrb[0].mxu0
    %1139 = vdwg.mxu0
    %v1140 = vsel %vm208, %v1078, 0.0
    %1141 = vadd.xlane.f32.xlu0 %v1140
    %v1142 = vpop.xlane.xlu0 %1141
    %v1143 = vsel %vm208, %v1081, 0.0
    %1144 = vadd.xlane.f32.xlu0 %v1143
    %v1145 = vpop.xlane.xlu0 %1144
    %v1146 = vsel %vm208, %v1086, 0.0
    %1147 = vadd.xlane.f32.xlu0 %v1146
    %v1148 = vpop.xlane.xlu0 %1147
    %v1149 = vsel %vm208, %v1089, 0.0
    %1150 = vadd.xlane.f32.xlu0 %v1149
    %v1151 = vpop.xlane.xlu0 %1150
    %v1152 = vsel %vm208, %v1094, 0.0
    %1153 = vadd.xlane.f32.xlu0 %v1152
    %v1154 = vpop.xlane.xlu0 %1153
    %v1155 = vsel %vm208, %v1097, 0.0
    %1156 = vadd.xlane.f32.xlu0 %v1155
    %v1157 = vpop.xlane.xlu0 %1156
    %v1158 = vsel %vm208, %v1102, 0.0
    %1159 = vadd.xlane.f32.xlu0 %v1158
    %v1160 = vpop.xlane.xlu0 %1159
    %v1161 = vsel %vm208, %v1105, 0.0
    %1162 = vadd.xlane.f32.xlu0 %v1161
    %v1163 = vpop.xlane.xlu0 %1162
    %v1164 = vsel %vm208, %v1110, 0.0
    %1165 = vadd.xlane.f32.xlu0 %v1164
    %v1166 = vpop.xlane.xlu0 %1165
    %v1167 = vsel %vm208, %v1113, 0.0
    %1168 = vadd.xlane.f32.xlu0 %v1167
    %v1169 = vpop.xlane.xlu0 %1168
    %v1170 = vsel %vm208, %v1118, 0.0
    %1171 = vadd.xlane.f32.xlu0 %v1170
    %v1172 = vpop.xlane.xlu0 %1171
    %v1173 = vsel %vm208, %v1121, 0.0
    %1174 = vadd.xlane.f32.xlu0 %v1173
    %v1175 = vpop.xlane.xlu0 %1174
    %v1176 = vsel %vm208, %v1126, 0.0
    %1177 = vadd.xlane.f32.xlu0 %v1176
    %v1178 = vpop.xlane.xlu0 %1177
    %v1179 = vsel %vm208, %v1129, 0.0
    %1180 = vadd.xlane.f32.xlu0 %v1179
    %v1181 = vpop.xlane.xlu0 %1180
    %v1182 = vsel %vm208, %v1134, 0.0
    %1183 = vadd.xlane.f32.xlu0 %v1182
    %v1184 = vpop.xlane.xlu0 %1183
    %v1185 = vsel %vm208, %v1137, 0.0
    %1186 = vadd.xlane.f32.xlu0 %v1185
    %v1187 = vpop.xlane.xlu0 %1186
    %v1188 = vmul.f32 %v1142, %v257
    %v1189 = vmul.f32 %v1145, %v257
    %v1190 = vmul.f32 %v1148, %v257
    %v1191 = vmul.f32 %v1151, %v257
    %v1192 = vmul.f32 %v1154, %v257
    %v1193 = vmul.f32 %v1157, %v257
    %v1194 = vmul.f32 %v1160, %v257
    %v1195 = vmul.f32 %v1163, %v257
    %v1196 = vmul.f32 %v1166, %v257
    %v1197 = vmul.f32 %v1169, %v257
    %v1198 = vmul.f32 %v1172, %v257
    %v1199 = vmul.f32 %v1175, %v257
    %v1200 = vmul.f32 %v1178, %v257
    %v1201 = vmul.f32 %v1181, %v257
    %v1202 = vmul.f32 %v1184, %v257
    %v1203 = vmul.f32 %v1187, %v257
    %v1204 = vmul.f32 %v1078, %v1078
    %v1205 = vmul.f32 %v1081, %v1081
    %v1206 = vmul.f32 %v1086, %v1086
    %v1207 = vmul.f32 %v1089, %v1089
    %v1208 = vmul.f32 %v1094, %v1094
    %v1209 = vmul.f32 %v1097, %v1097
    %v1210 = vmul.f32 %v1102, %v1102
    %v1211 = vmul.f32 %v1105, %v1105
    %v1212 = vmul.f32 %v1110, %v1110
    %v1213 = vmul.f32 %v1113, %v1113
    %v1214 = vmul.f32 %v1118, %v1118
    %v1215 = vmul.f32 %v1121, %v1121
    %v1216 = vmul.f32 %v1126, %v1126
    %v1217 = vmul.f32 %v1129, %v1129
    %v1218 = vmul.f32 %v1134, %v1134
    %v1219 = vmul.f32 %v1137, %v1137
    %v1220 = vsel %vm208, %v1204, 0.0
    %1221 = vadd.xlane.f32.xlu0 %v1220
    %v1222 = vpop.xlane.xlu0 %1221
    %v1223 = vsel %vm208, %v1205, 0.0
    %1224 = vadd.xlane.f32.xlu0 %v1223
    %v1225 = vpop.xlane.xlu0 %1224
    %v1226 = vsel %vm208, %v1206, 0.0
    %1227 = vadd.xlane.f32.xlu0 %v1226
    %v1228 = vpop.xlane.xlu0 %1227
    %v1229 = vsel %vm208, %v1207, 0.0
    %1230 = vadd.xlane.f32.xlu0 %v1229
    %v1231 = vpop.xlane.xlu0 %1230
    %v1232 = vsel %vm208, %v1208, 0.0
    %1233 = vadd.xlane.f32.xlu0 %v1232
    %v1234 = vpop.xlane.xlu0 %1233
    %v1235 = vsel %vm208, %v1209, 0.0
    %1236 = vadd.xlane.f32.xlu0 %v1235
    %v1237 = vpop.xlane.xlu0 %1236
    %v1238 = vsel %vm208, %v1210, 0.0
    %1239 = vadd.xlane.f32.xlu0 %v1238
    %v1240 = vpop.xlane.xlu0 %1239
    %v1241 = vsel %vm208, %v1211, 0.0
    %1242 = vadd.xlane.f32.xlu0 %v1241
    %v1243 = vpop.xlane.xlu0 %1242
    %v1244 = vsel %vm208, %v1212, 0.0
    %1245 = vadd.xlane.f32.xlu0 %v1244
    %v1246 = vpop.xlane.xlu0 %1245
    %v1247 = vsel %vm208, %v1213, 0.0
    %1248 = vadd.xlane.f32.xlu0 %v1247
    %v1249 = vpop.xlane.xlu0 %1248
    %v1250 = vsel %vm208, %v1214, 0.0
    %1251 = vadd.xlane.f32.xlu0 %v1250
    %v1252 = vpop.xlane.xlu0 %1251
    %v1253 = vsel %vm208, %v1215, 0.0
    %1254 = vadd.xlane.f32.xlu0 %v1253
    %v1255 = vpop.xlane.xlu0 %1254
    %v1256 = vsel %vm208, %v1216, 0.0
    %1257 = vadd.xlane.f32.xlu0 %v1256
    %v1258 = vpop.xlane.xlu0 %1257
    %v1259 = vsel %vm208, %v1217, 0.0
    %1260 = vadd.xlane.f32.xlu0 %v1259
    %v1261 = vpop.xlane.xlu0 %1260
    %v1262 = vsel %vm208, %v1218, 0.0
    %1263 = vadd.xlane.f32.xlu0 %v1262
    %v1264 = vpop.xlane.xlu0 %1263
    %v1265 = vsel %vm208, %v1219, 0.0
    %1266 = vadd.xlane.f32.xlu0 %v1265
    %v1267 = vpop.xlane.xlu0 %1266
    %v1268 = vmul.f32 %v1222, %v257
    %v1269 = vmul.f32 %v1225, %v257
    %v1270 = vmul.f32 %v1228, %v257
    %v1271 = vmul.f32 %v1231, %v257
    %v1272 = vmul.f32 %v1234, %v257
    %v1273 = vmul.f32 %v1237, %v257
    %v1274 = vmul.f32 %v1240, %v257
    %v1275 = vmul.f32 %v1243, %v257
    %v1276 = vmul.f32 %v1246, %v257
    %v1277 = vmul.f32 %v1249, %v257
    %v1278 = vmul.f32 %v1252, %v257
    %v1279 = vmul.f32 %v1255, %v257
    %v1280 = vmul.f32 %v1258, %v257
    %v1281 = vmul.f32 %v1261, %v257
    %v1282 = vmul.f32 %v1264, %v257
    %v1283 = vmul.f32 %v1267, %v257
    %v1284 = vmul.f32 %v1188, %v1188
    %v1285 = vmul.f32 %v1189, %v1189
    %v1286 = vmul.f32 %v1190, %v1190
    %v1287 = vmul.f32 %v1191, %v1191
    %v1288 = vmul.f32 %v1192, %v1192
    %v1289 = vmul.f32 %v1193, %v1193
    %v1290 = vmul.f32 %v1194, %v1194
    %v1291 = vmul.f32 %v1195, %v1195
    %v1292 = vmul.f32 %v1196, %v1196
    %v1293 = vmul.f32 %v1197, %v1197
    %v1294 = vmul.f32 %v1198, %v1198
    %v1295 = vmul.f32 %v1199, %v1199
    %v1296 = vmul.f32 %v1200, %v1200
    %v1297 = vmul.f32 %v1201, %v1201
    %v1298 = vmul.f32 %v1202, %v1202
    %v1299 = vmul.f32 %v1203, %v1203
    %v1300 = vsub.f32 %v1268, %v1284
    %v1301 = vsub.f32 %v1269, %v1285
    %v1302 = vsub.f32 %v1270, %v1286
    %v1303 = vsub.f32 %v1271, %v1287
    %v1304 = vsub.f32 %v1272, %v1288
    %v1305 = vsub.f32 %v1273, %v1289
    %v1306 = vsub.f32 %v1274, %v1290
    %v1307 = vsub.f32 %v1275, %v1291
    %v1308 = vsub.f32 %v1276, %v1292
    %v1309 = vsub.f32 %v1277, %v1293
    %v1310 = vsub.f32 %v1278, %v1294
    %v1311 = vsub.f32 %v1279, %v1295
    %v1312 = vsub.f32 %v1280, %v1296
    %v1313 = vsub.f32 %v1281, %v1297
    %v1314 = vsub.f32 %v1282, %v1298
    %v1315 = vsub.f32 %v1283, %v1299
    %v1316 = vsub.f32 %v1078, %v1188
    %v1317 = vsub.f32 %v1081, %v1189
    %v1318 = vsub.f32 %v1086, %v1190
    %v1319 = vsub.f32 %v1089, %v1191
    %v1320 = vsub.f32 %v1094, %v1192
    %v1321 = vsub.f32 %v1097, %v1193
    %v1322 = vsub.f32 %v1102, %v1194
    %v1323 = vsub.f32 %v1105, %v1195
    %v1324 = vsub.f32 %v1110, %v1196
    %v1325 = vsub.f32 %v1113, %v1197
    %v1326 = vsub.f32 %v1118, %v1198
    %v1327 = vsub.f32 %v1121, %v1199
    %v1328 = vsub.f32 %v1126, %v1200
    %v1329 = vsub.f32 %v1129, %v1201
    %v1330 = vsub.f32 %v1134, %v1202
    %v1331 = vsub.f32 %v1137, %v1203
    %v1332 = vadd.f32 %v1300, 1e-05
    %v1333 = vadd.f32 %v1301, 1e-05
    %v1334 = vadd.f32 %v1302, 1e-05
    %v1335 = vadd.f32 %v1303, 1e-05
    %v1336 = vadd.f32 %v1304, 1e-05
    %v1337 = vadd.f32 %v1305, 1e-05
    %v1338 = vadd.f32 %v1306, 1e-05
    %v1339 = vadd.f32 %v1307, 1e-05
    %v1340 = vadd.f32 %v1308, 1e-05
    %v1341 = vadd.f32 %v1309, 1e-05
    %v1342 = vadd.f32 %v1310, 1e-05
    %v1343 = vadd.f32 %v1311, 1e-05
    %v1344 = vadd.f32 %v1312, 1e-05
    %v1345 = vadd.f32 %v1313, 1e-05
    %v1346 = vadd.f32 %v1314, 1e-05
    %v1347 = vadd.f32 %v1315, 1e-05
    %v1348 = vrsqrt.pop %v1332
    %v1349 = vrsqrt.pop %v1333
    %v1350 = vrsqrt.pop %v1334
    %v1351 = vrsqrt.pop %v1335
    %v1352 = vrsqrt.pop %v1336
    %v1353 = vrsqrt.pop %v1337
    %v1354 = vrsqrt.pop %v1338
    %v1355 = vrsqrt.pop %v1339
    %v1356 = vrsqrt.pop %v1340
    %v1357 = vrsqrt.pop %v1341
    %v1358 = vrsqrt.pop %v1342
    %v1359 = vrsqrt.pop %v1343
    %v1360 = vrsqrt.pop %v1344
    %v1361 = vrsqrt.pop %v1345
    %v1362 = vrsqrt.pop %v1346
    %v1363 = vrsqrt.pop %v1347
    %v1364 = vmul.f32 %v1316, %v1348
    %v1365 = vmul.f32 %v1317, %v1349
    %v1366 = vmul.f32 %v1318, %v1350
    %v1367 = vmul.f32 %v1319, %v1351
    %v1368 = vmul.f32 %v1320, %v1352
    %v1369 = vmul.f32 %v1321, %v1353
    %v1370 = vmul.f32 %v1322, %v1354
    %v1371 = vmul.f32 %v1323, %v1355
    %v1372 = vmul.f32 %v1324, %v1356
    %v1373 = vmul.f32 %v1325, %v1357
    %v1374 = vmul.f32 %v1326, %v1358
    %v1375 = vmul.f32 %v1327, %v1359
    %v1376 = vmul.f32 %v1328, %v1360
    %v1377 = vmul.f32 %v1329, %v1361
    %v1378 = vmul.f32 %v1330, %v1362
    %v1379 = vmul.f32 %v1331, %v1363
    %v1380 = vmax.f32 %v1364, -1.0
    %v1381 = vmax.f32 %v1365, -1.0
    %v1382 = vmax.f32 %v1366, -1.0
    %v1383 = vmax.f32 %v1367, -1.0
    %v1384 = vmax.f32 %v1368, -1.0
    %v1385 = vmax.f32 %v1369, -1.0
    %v1386 = vmax.f32 %v1370, -1.0
    %v1387 = vmax.f32 %v1371, -1.0
    %v1388 = vmax.f32 %v1372, -1.0
    %v1389 = vmax.f32 %v1373, -1.0
    %v1390 = vmax.f32 %v1374, -1.0
    %v1391 = vmax.f32 %v1375, -1.0
    %v1392 = vmax.f32 %v1376, -1.0
    %v1393 = vmax.f32 %v1377, -1.0
    %v1394 = vmax.f32 %v1378, -1.0
    %v1395 = vmax.f32 %v1379, -1.0
    %v1396 = vmin.f32 %v1380, 1.0
    %v1397 = vmin.f32 %v1381, 1.0
    %v1398 = vmin.f32 %v1382, 1.0
    %v1399 = vmin.f32 %v1383, 1.0
    %v1400 = vmin.f32 %v1384, 1.0
    %v1401 = vmin.f32 %v1385, 1.0
    %v1402 = vmin.f32 %v1386, 1.0
    %v1403 = vmin.f32 %v1387, 1.0
    %v1404 = vmin.f32 %v1388, 1.0
    %v1405 = vmin.f32 %v1389, 1.0
    %v1406 = vmin.f32 %v1390, 1.0
    %v1407 = vmin.f32 %v1391, 1.0
    %v1408 = vmin.f32 %v1392, 1.0
    %v1409 = vmin.f32 %v1393, 1.0
    %v1410 = vmin.f32 %v1394, 1.0
    %v1411 = vmin.f32 %v1395, 1.0
    %v1412 = vld [vmem:[%s4] sm:$0x1]
    %vm1413 = vcmp.ge.f32.partialorder %v1396, 0.0
    %vm1414 = vcmp.ge.f32.partialorder %v1397, 0.0
    %vm1415 = vcmp.ge.f32.partialorder %v1398, 0.0
    %vm1416 = vcmp.ge.f32.partialorder %v1399, 0.0
    %vm1417 = vcmp.ge.f32.partialorder %v1400, 0.0
    %vm1418 = vcmp.ge.f32.partialorder %v1401, 0.0
    %vm1419 = vcmp.ge.f32.partialorder %v1402, 0.0
    %vm1420 = vcmp.ge.f32.partialorder %v1403, 0.0
    %vm1421 = vcmp.ge.f32.partialorder %v1404, 0.0
    %vm1422 = vcmp.ge.f32.partialorder %v1405, 0.0
    %vm1423 = vcmp.ge.f32.partialorder %v1406, 0.0
    %vm1424 = vcmp.ge.f32.partialorder %v1407, 0.0
    %vm1425 = vcmp.ge.f32.partialorder %v1408, 0.0
    %vm1426 = vcmp.ge.f32.partialorder %v1409, 0.0
    %vm1427 = vcmp.ge.f32.partialorder %v1410, 0.0
    %vm1428 = vcmp.ge.f32.partialorder %v1411, 0.0
    %v1429 = vsel %vm1413, 1.0, -1.0
    %v1430 = vsel %vm1414, 1.0, -1.0
    %v1431 = vsel %vm1415, 1.0, -1.0
    %v1432 = vsel %vm1416, 1.0, -1.0
    %v1433 = vsel %vm1417, 1.0, -1.0
    %v1434 = vsel %vm1418, 1.0, -1.0
    %v1435 = vsel %vm1419, 1.0, -1.0
    %v1436 = vsel %vm1420, 1.0, -1.0
    %v1437 = vsel %vm1421, 1.0, -1.0
    %v1438 = vsel %vm1422, 1.0, -1.0
    %v1439 = vsel %vm1423, 1.0, -1.0
    %v1440 = vsel %vm1424, 1.0, -1.0
    %v1441 = vsel %vm1425, 1.0, -1.0
    %v1442 = vsel %vm1426, 1.0, -1.0
    %v1443 = vsel %vm1427, 1.0, -1.0
    %v1444 = vsel %vm1428, 1.0, -1.0
    %v1445 = vpack.c.bf16 %v1430, %v1429
    %v1446 = vpack.c.bf16 %v1432, %v1431
    %v1447 = vpack.c.bf16 %v1434, %v1433
    %v1448 = vpack.c.bf16 %v1436, %v1435
    %v1449 = vpack.c.bf16 %v1438, %v1437
    %v1450 = vpack.c.bf16 %v1440, %v1439
    %v1451 = vpack.c.bf16 %v1442, %v1441
    %v1452 = vpack.c.bf16 %v1444, %v1443
    %v1454 = vsel %vm208, %v1412, 0
    %v1457 = vsel %vm208, %v1445, 0
    %v1460 = vsel %vm208, %v1446, 0
    %v1463 = vsel %vm208, %v1447, 0
    %v1466 = vsel %vm208, %v1448, 0
    %v1469 = vsel %vm208, %v1449, 0
    %v1472 = vsel %vm208, %v1450, 0
    %v1475 = vsel %vm208, %v1451, 0
    %v1478 = vsel %vm208, %v1452, 0
    %1480 = vmatprep.subr.bf16.mxu0 0
    %1481 = vmatpush1.bf16.xpose.msra.mxu0 %v1457
    %1482 = vmatprep.subr.bf16.mxu0 0
    %1483 = vmatpush1.bf16.xpose.msra.mxu0 %v1460
    %1484 = vmatprep.subr.bf16.mxu0 0
    %1485 = vmatpush1.bf16.xpose.msra.mxu0 %v1463
    %1486 = vmatprep.subr.bf16.mxu0 0
    %1487 = vmatpush1.bf16.xpose.msra.mxu0 %v1466
    %1488 = vmatprep.subr.bf16.mxu0 0
    %1489 = vmatpush1.bf16.xpose.msra.mxu0 %v1469
    %1490 = vmatprep.subr.bf16.mxu0 0
    %1491 = vmatpush1.bf16.xpose.msra.mxu0 %v1472
    %1492 = vmatprep.subr.bf16.mxu0 0
    %1493 = vmatpush1.bf16.xpose.msra.mxu0 %v1475
    %1494 = vmatprep.subr.bf16.mxu0 0
    %1495 = vmatpush1.bf16.xpose.msra.mxu0 %v1478
    %1496 = vmatprep.subr.bf16.mxu0 0
    %1497 = vmatpush1.bf16.xpose.msra.mxu0 0
    %1498 = vmatprep.subr.bf16.mxu0 0
    %1499 = vmatpush1.bf16.xpose.msra.mxu0 0
    %1500 = vmatprep.subr.bf16.mxu0 0
    %1501 = vmatpush1.bf16.xpose.msra.mxu0 0
    %1502 = vmatprep.subr.bf16.mxu0 0
    %1503 = vmatpush1.bf16.xpose.msra.mxu0 0
    %1504 = vmatprep.subr.bf16.mxu0 0
    %1505 = vmatpush1.bf16.xpose.msra.mxu0 0
    %1506 = vmatprep.subr.bf16.mxu0 0
    %1507 = vmatpush1.bf16.xpose.msra.mxu0 0
    %1508 = vmatprep.subr.bf16.mxu0 0
    %1509 = vmatpush1.bf16.xpose.msra.mxu0 0
    %1510 = vmatprep.subr.bf16.mxu0 0
    %1511 = vmatpush1.bf16.xpose.msra.mxu0 0
    %1512 = vmatprep.mubr.bf16.mxu0 0
    %1513 = vmatmul.mubr.bf16.gmra.mrb[0].mxu0 %v1454
    %v1514 = vpop.f32.mrb[0].mxu0
    %v1515 = vadd.f32 0.0, %v1514
    %v1516 = vpop.f32.mrb[0].mxu0
    %v1517 = vpop.f32.mrb[0].mxu0
    %v1518 = vpop.f32.mrb[0].mxu0
    %1519 = vdwg.mxu0
    %v1521 = vrot.slane %v1515, 1
    %v1523 = vsub.f32 %v1515, %v1521
    %v1524 = vsub.f32 0.0, %v1523
    %v1525 = vmax.f32 %v1524, 0.0
    %v1526 = vand.u32 2147483647, %v1524
    %v1527 = vsub.f32 0.0, %v1526
    %v1528 = vmul.f32 %v1527, 1.442695
    %v1529 = vpow.pop %v1528
    %v1530 = vadd.f32 %v1529, 1.0
    %v1531 = vlog2.pop %v1530
    %v1532 = vmul.f32 %v1531, 0.6931472
    %v1533 = vadd.f32 %v1525, %v1532
    %v1534 = vsub.f32 0.0, %v1533
    %1535 = vst [vmem:[#allocation2] sm:$0x1] %v1534
    %v1536 = vmax.f32 %v1523, 0.0
    %v1537 = vand.u32 2147483647, %v1523
    %v1538 = vsub.f32 0.0, %v1537
    %v1539 = vmul.f32 %v1538, 1.442695
    %v1540 = vpow.pop %v1539
    %v1541 = vadd.f32 %v1540, 1.0
    %v1542 = vlog2.pop %v1541
    %v1543 = vmul.f32 %v1542, 0.6931472
    %v1544 = vadd.f32 %v1536, %v1543
    %v1545 = vsub.f32 0.0, %v1544
    %1546 = vst [vmem:[#allocation2 + $0x1] sm:$0x1] %v1545
    // Predicated region
    $region22: #{net_forward.1} parent=1 // pred_check
      _
    $region23: #{net_forward.1} parent=1 // pred_check_branch
      %1548 = sbr.rel (0) target = $region25
    $region24: #{net_forward.1} parent=1 // pred_region
      %s1550 = ssub.s32 32, 32
      %1551 = vsyncadd [#allocation3], %s1550
      %s1553 = sshll.u32 [#allocation2], 4
      %s1554 = int_to_ptr.vmem [resolvable:$true] %s1553
      %1556 = dma.vmem_to_hbm [thread:$0]  %s1554, 32, %s5, [#allocation3]
    $region25: #{net_forward.1} parent=1 // pred_fallthru
      _
    // Predicated region
    $region26: #{net_forward.1} parent=1 // pred_check
      _
    $region27: #{net_forward.1} parent=1 // pred_check_branch
      %1558 = sbr.rel (0) target = $region29
    $region28: #{net_forward.1} parent=1 // pred_region
      %1559 = dma.done [#allocation3], 32
    $region29: #{net_forward.1} parent=1 // pred_fallthru
      _
    %1560 = vsyncpa [#allocation3], 1

</llo_original>
